<compile_context>
chip_gen: v6e
topology: v6e:2x2x1
jax: 0.10.0
libtpu: 0.0.40
codegen_flags: <defaults>
</compile_context>

<pallas_src>
import functools
import math

import jax
import jax.numpy as jnp
from jax.experimental import pallas as pl
from jax.experimental.pallas import tpu as pltpu


def _layer_norm(x, gamma, beta, eps=1e-5):
    mean = jnp.mean(x, axis=-1, keepdims=True)
    var = jnp.mean((x - mean) ** 2, axis=-1, keepdims=True)
    return (x - mean) * jax.lax.rsqrt(var + eps) * gamma + beta


def decoder_kernel(
    x_ref, mask_ref,
    ln1_g_ref, ln1_b_ref,
    wq_ref, bq_ref, wk_ref, bk_ref, wv_ref, bv_ref, wo_ref, bo_ref,
    ln2_g_ref, ln2_b_ref,
    w1_ref, b1_ref, w2_ref, b2_ref,
    out_ref,
    *, num_heads: int,
):
    x = x_ref[0]                          # (S, D) f32
    S, D = x.shape
    H = num_heads
    dh = D // H
    scale = 1.0 / math.sqrt(dh)

    # Additive mask bias computed ONCE (hoisted out of the head loop).
    mask_bias = jnp.where(mask_ref[...] > 0, 0.0, -1e9).astype(jnp.float32)  # (S, S)

    # ---- sublayer 1: x + MaskedAttention(LayerNorm(x), mask) ----------------
    xn = _layer_norm(x, ln1_g_ref[...], ln1_b_ref[...])          # f32
    xn_b = xn.astype(jnp.bfloat16)                               # MXU input

    q = jnp.dot(xn_b, wq_ref[...], preferred_element_type=jnp.float32) + bq_ref[...]
    k = jnp.dot(xn_b, wk_ref[...], preferred_element_type=jnp.float32) + bk_ref[...]
    v = jnp.dot(xn_b, wv_ref[...], preferred_element_type=jnp.float32) + bv_ref[...]

    q = q * scale                     # scale Q once: O(S*D) instead of O(H*S^2)

    q_b = q.astype(jnp.bfloat16)
    k_b = k.astype(jnp.bfloat16)
    v_b = v.astype(jnp.bfloat16)
    wo = wo_ref[...]                  # (D, D) bf16

    attn = jnp.zeros((S, D), jnp.float32)
    for h in range(H):                # unrolled over heads; no concatenate
        sl = slice(h * dh, (h + 1) * dh)
        qh = q_b[:, sl]               # (S, dh) bf16
        kh = k_b[:, sl]
        vh = v_b[:, sl]
        # scores = qh @ kh^T  (contract last dims directly, no materialized transpose)
        scores = jax.lax.dot_general(
            qh, kh, (((1,), (1,)), ((), ())),
            preferred_element_type=jnp.float32) + mask_bias       # (S, S) f32
        m = jnp.max(scores, axis=-1, keepdims=True)
        e = jnp.exp(scores - m)
        denom = jnp.sum(e, axis=-1, keepdims=True)
        p = e * pl.reciprocal(denom, approx=True)                 # EUP, not a divide
        ctx = jnp.dot(p.astype(jnp.bfloat16), vh,
                      preferred_element_type=jnp.float32)         # (S, dh) f32
        # Project this head through its slice of W_o and accumulate (replaces concat).
        attn += jnp.dot(ctx.astype(jnp.bfloat16), wo[sl, :],
                        preferred_element_type=jnp.float32)
    attn = attn + bo_ref[...]

    res1 = x + attn

    # ---- sublayer 2: res1 + FeedF(LayerNorm(res1)) ---------------------------
    yn = _layer_norm(res1, ln2_g_ref[...], ln2_b_ref[...])
    h1 = jnp.dot(yn.astype(jnp.bfloat16), w1_ref[...],
                 preferred_element_type=jnp.float32) + b1_ref[...]
    h1 = jax.nn.gelu(h1)                                          # f32 elementwise
    ff = jnp.dot(h1.astype(jnp.bfloat16), w2_ref[...],
                 preferred_element_type=jnp.float32) + b2_ref[...]

    out_ref[0] = res1 + ff


def decoder_module(x, mask, params, *, num_heads):
    B, S, D = x.shape
    Dff = params["w1"].shape[1]

    def row(v):  # 1-D vector -> lane-major (1, N) f32 block
        return v.reshape(1, -1).astype(jnp.float32)

    def mat(w):  # weight matrix -> bf16 MXU operand (halves weight VMEM too)
        return w.astype(jnp.bfloat16)

    weight_args = (
        row(params["ln1_g"]), row(params["ln1_b"]),
        mat(params["wq"]), row(params["bq"]),
        mat(params["wk"]), row(params["bk"]),
        mat(params["wv"]), row(params["bv"]),
        mat(params["wo"]), row(params["bo"]),
        row(params["ln2_g"]), row(params["ln2_b"]),
        mat(params["w1"]), row(params["b1"]),
        mat(params["w2"]), row(params["b2"]),
    )

    def full_spec(shape):
        nd = len(shape)
        return pl.BlockSpec(shape, lambda b, _nd=nd: (0,) * _nd)

    in_specs = [
        pl.BlockSpec((1, S, D), lambda b: (b, 0, 0)),   # x (per-batch-element block)
        full_spec((S, S)),                              # mask
    ] + [full_spec(w.shape) for w in weight_args]

    # Explicit scoped-VMEM budget: double-buffered blocks + in-kernel intermediates,
    # with 2x headroom; floor 32 MiB, cap 64 MiB (v7x physical VMEM).
    def nbytes(a):
        return int(a.size) * a.dtype.itemsize
    block_bytes = 2 * (2 * S * D * 4)                    # x + out, double-buffered
    block_bytes += 2 * S * S * 4                         # mask
    block_bytes += sum(2 * nbytes(w) for w in weight_args)
    interm_bytes = 4 * (8 * S * D + 3 * S * S + 2 * S * Dff)
    vmem_limit = int(min(64 * 2**20, max(32 * 2**20, 2 * (block_bytes + interm_bytes))))

    kernel = functools.partial(decoder_kernel, num_heads=num_heads)

    return pl.pallas_call(
        kernel,
        out_shape=jax.ShapeDtypeStruct((B, S, D), jnp.float32),
        grid_spec=pltpu.PrefetchScalarGridSpec(
            num_scalar_prefetch=0,
            grid=(B,),
            in_specs=in_specs,
            out_specs=pl.BlockSpec((1, S, D), lambda b: (b, 0, 0)),
        ),
        compiler_params=pltpu.CompilerParams(
            dimension_semantics=("parallel",),
            vmem_limit_bytes=vmem_limit),
    )(x, mask, *weight_args)


def init_params(key, d_model, d_ff):
    ks = jax.random.split(key, 8)
    std = 0.02
    return {
        "ln1_g": jnp.ones((d_model,), jnp.float32),
        "ln1_b": jnp.zeros((d_model,), jnp.float32),
        "wq": std * jax.random.normal(ks[0], (d_model, d_model), jnp.float32),
        "bq": jnp.zeros((d_model,), jnp.float32),
        "wk": std * jax.random.normal(ks[1], (d_model, d_model), jnp.float32),
        "bk": jnp.zeros((d_model,), jnp.float32),
        "wv": std * jax.random.normal(ks[2], (d_model, d_model), jnp.float32),
        "bv": jnp.zeros((d_model,), jnp.float32),
        "wo": std * jax.random.normal(ks[3], (d_model, d_model), jnp.float32),
        "bo": jnp.zeros((d_model,), jnp.float32),
        "ln2_g": jnp.ones((d_model,), jnp.float32),
        "ln2_b": jnp.zeros((d_model,), jnp.float32),
        "w1": std * jax.random.normal(ks[4], (d_model, d_ff), jnp.float32),
        "b1": jnp.zeros((d_ff,), jnp.float32),
        "w2": std * jax.random.normal(ks[5], (d_ff, d_model), jnp.float32),
        "b2": jnp.zeros((d_model,), jnp.float32),
    }


if __name__ == "__main__":
    B, S, D, H, Dff = 2, 8, 32, 4, 64

    key = jax.random.PRNGKey(0)
    k_x, k_p = jax.random.split(key)
    x = jax.random.normal(k_x, (B, S, D), jnp.float32)
    # causal mask: 1 = attend, 0 = masked
    mask = jnp.tril(jnp.ones((S, S), jnp.float32))
    params = init_params(k_p, D, Dff)

    out = decoder_module(x, mask, params, num_heads=H)
    out = jax.block_until_ready(out)
    assert out.shape == (B, S, D) and out.dtype == jnp.float32
    print("KERNEL_OK")
</pallas_src>

<mosaic_0001>
module attributes {stable_mosaic.version = 11 : i64} {
  func.func @decoder_kernel(%arg0: i32, %arg1: memref<1x8x32xf32, #tpu.memory_space<vmem>>, %arg2: memref<8x8xf32, #tpu.memory_space<vmem>>, %arg3: memref<1x32xf32, #tpu.memory_space<vmem>>, %arg4: memref<1x32xf32, #tpu.memory_space<vmem>>, %arg5: memref<32x32xbf16, #tpu.memory_space<vmem>>, %arg6: memref<1x32xf32, #tpu.memory_space<vmem>>, %arg7: memref<32x32xbf16, #tpu.memory_space<vmem>>, %arg8: memref<1x32xf32, #tpu.memory_space<vmem>>, %arg9: memref<32x32xbf16, #tpu.memory_space<vmem>>, %arg10: memref<1x32xf32, #tpu.memory_space<vmem>>, %arg11: memref<32x32xbf16, #tpu.memory_space<vmem>>, %arg12: memref<1x32xf32, #tpu.memory_space<vmem>>, %arg13: memref<1x32xf32, #tpu.memory_space<vmem>>, %arg14: memref<1x32xf32, #tpu.memory_space<vmem>>, %arg15: memref<32x64xbf16, #tpu.memory_space<vmem>>, %arg16: memref<1x64xf32, #tpu.memory_space<vmem>>, %arg17: memref<64x32xbf16, #tpu.memory_space<vmem>>, %arg18: memref<1x32xf32, #tpu.memory_space<vmem>>, %arg19: memref<1x8x32xf32, #tpu.memory_space<vmem>>) attributes {dimension_semantics = [#tpu.dimension_semantics<parallel>], iteration_bounds = array<i64: 2>, scalar_prefetch = 0 : i64, scratch_operands = 0 : i64, tpu.core_type = #tpu.core_type<tc>, window_params = [{transform_indices = @transform_0, window_bounds = array<i64: 1, 8, 32>}, {pipeline_mode = #tpu.pipeline_mode<synchronous>, transform_indices = @transform_1, window_bounds = array<i64: 8, 8>}, {pipeline_mode = #tpu.pipeline_mode<synchronous>, transform_indices = @transform_2, window_bounds = array<i64: 1, 32>}, {pipeline_mode = #tpu.pipeline_mode<synchronous>, transform_indices = @transform_3, window_bounds = array<i64: 1, 32>}, {pipeline_mode = #tpu.pipeline_mode<synchronous>, transform_indices = @transform_4, window_bounds = array<i64: 32, 32>}, {pipeline_mode = #tpu.pipeline_mode<synchronous>, transform_indices = @transform_5, window_bounds = array<i64: 1, 32>}, {pipeline_mode = #tpu.pipeline_mode<synchronous>, transform_indices = @transform_6, window_bounds = array<i64: 32, 32>}, {pipeline_mode = #tpu.pipeline_mode<synchronous>, transform_indices = @transform_7, window_bounds = array<i64: 1, 32>}, {pipeline_mode = #tpu.pipeline_mode<synchronous>, transform_indices = @transform_8, window_bounds = array<i64: 32, 32>}, {pipeline_mode = #tpu.pipeline_mode<synchronous>, transform_indices = @transform_9, window_bounds = array<i64: 1, 32>}, {pipeline_mode = #tpu.pipeline_mode<synchronous>, transform_indices = @transform_10, window_bounds = array<i64: 32, 32>}, {pipeline_mode = #tpu.pipeline_mode<synchronous>, transform_indices = @transform_11, window_bounds = array<i64: 1, 32>}, {pipeline_mode = #tpu.pipeline_mode<synchronous>, transform_indices = @transform_12, window_bounds = array<i64: 1, 32>}, {pipeline_mode = #tpu.pipeline_mode<synchronous>, transform_indices = @transform_13, window_bounds = array<i64: 1, 32>}, {pipeline_mode = #tpu.pipeline_mode<synchronous>, transform_indices = @transform_14, window_bounds = array<i64: 32, 64>}, {pipeline_mode = #tpu.pipeline_mode<synchronous>, transform_indices = @transform_15, window_bounds = array<i64: 1, 64>}, {pipeline_mode = #tpu.pipeline_mode<synchronous>, transform_indices = @transform_16, window_bounds = array<i64: 64, 32>}, {pipeline_mode = #tpu.pipeline_mode<synchronous>, transform_indices = @transform_17, window_bounds = array<i64: 1, 32>}, {transform_indices = @transform_18, window_bounds = array<i64: 1, 8, 32>}]} {
    %c0 = arith.constant 0 : index
    %c0_0 = arith.constant 0 : index
    %c0_1 = arith.constant 0 : index
    %0 = vector.load %arg1[%c0, %c0_0, %c0_1] : memref<1x8x32xf32, #tpu.memory_space<vmem>>, vector<1x8x32xf32>
    %1 = vector.shape_cast %0 : vector<1x8x32xf32> to vector<8x32xf32>
    %c0_2 = arith.constant 0 : index
    %c0_3 = arith.constant 0 : index
    %2 = vector.load %arg2[%c0_2, %c0_3] : memref<8x8xf32, #tpu.memory_space<vmem>>, vector<8x8xf32>
    %cst = arith.constant 0.000000e+00 : f32
    %3 = vector.broadcast %cst : f32 to vector<8x8xf32>
    %4 = arith.cmpf ogt, %2, %3 : vector<8x8xf32>
    %cst_4 = arith.constant 0.000000e+00 : f32
    %cst_5 = arith.constant -1.000000e+09 : f32
    %5 = vector.broadcast %cst_4 : f32 to vector<8x8xf32>
    %6 = vector.broadcast %cst_5 : f32 to vector<8x8xf32>
    %7 = arith.select %4, %5, %6 : vector<8x8xi1>, vector<8x8xf32>
    %c0_6 = arith.constant 0 : index
    %c0_7 = arith.constant 0 : index
    %8 = vector.load %arg3[%c0_6, %c0_7] : memref<1x32xf32, #tpu.memory_space<vmem>>, vector<1x32xf32>
    %c0_8 = arith.constant 0 : index
    %c0_9 = arith.constant 0 : index
    %9 = vector.load %arg4[%c0_8, %c0_9] : memref<1x32xf32, #tpu.memory_space<vmem>>, vector<1x32xf32>
    %cst_10 = arith.constant dense<0.000000e+00> : vector<8xf32>
    %10 = vector.multi_reduction <add>, %1, %cst_10 [1] : vector<8x32xf32> to vector<8xf32>
    %11 = vector.shape_cast %10 : vector<8xf32> to vector<8x1xf32>
    %cst_11 = arith.constant 3.200000e+01 : f32
    %12 = vector.broadcast %cst_11 : f32 to vector<8x1xf32>
    %13 = arith.divf %11, %12 : vector<8x1xf32>
    %14 = vector.broadcast %13 : vector<8x1xf32> to vector<8x32xf32>
    %15 = arith.subf %1, %14 : vector<8x32xf32>
    %16 = arith.mulf %15, %15 : vector<8x32xf32>
    %cst_12 = arith.constant dense<0.000000e+00> : vector<8xf32>
    %17 = vector.multi_reduction <add>, %16, %cst_12 [1] : vector<8x32xf32> to vector<8xf32>
    %18 = vector.shape_cast %17 : vector<8xf32> to vector<8x1xf32>
    %cst_13 = arith.constant 3.200000e+01 : f32
    %19 = vector.broadcast %cst_13 : f32 to vector<8x1xf32>
    %20 = arith.divf %18, %19 : vector<8x1xf32>
    %21 = vector.broadcast %13 : vector<8x1xf32> to vector<8x32xf32>
    %22 = arith.subf %1, %21 : vector<8x32xf32>
    %cst_14 = arith.constant 9.99999974E-6 : f32
    %23 = vector.broadcast %cst_14 : f32 to vector<8x1xf32>
    %24 = arith.addf %20, %23 : vector<8x1xf32>
    %25 = math.rsqrt %24 : vector<8x1xf32>
    %26 = vector.broadcast %25 : vector<8x1xf32> to vector<8x32xf32>
    %27 = arith.mulf %22, %26 : vector<8x32xf32>
    %28 = vector.broadcast %8 : vector<1x32xf32> to vector<8x32xf32>
    %29 = arith.mulf %27, %28 : vector<8x32xf32>
    %30 = vector.broadcast %9 : vector<1x32xf32> to vector<8x32xf32>
    %31 = arith.addf %29, %30 : vector<8x32xf32>
    %32 = arith.truncf %31 : vector<8x32xf32> to vector<8x32xbf16>
    %c0_15 = arith.constant 0 : index
    %c0_16 = arith.constant 0 : index
    %33 = vector.load %arg5[%c0_15, %c0_16] : memref<32x32xbf16, #tpu.memory_space<vmem>>, vector<32x32xbf16>
    %cst_17 = arith.constant dense<0.000000e+00> : vector<8x32xf32>
    %34 = tpu.matmul %32, %33, %cst_17 {dimension_numbers = #tpu.dot_dimension_numbers<[1], [0], [0], [1], [0, 0, 1, 1], [], []>} : vector<8x32xbf16>, vector<32x32xbf16>, vector<8x32xf32> -> vector<8x32xf32>
    %c0_18 = arith.constant 0 : index
    %c0_19 = arith.constant 0 : index
    %35 = vector.load %arg6[%c0_18, %c0_19] : memref<1x32xf32, #tpu.memory_space<vmem>>, vector<1x32xf32>
    %36 = vector.broadcast %35 : vector<1x32xf32> to vector<8x32xf32>
    %37 = arith.addf %34, %36 : vector<8x32xf32>
    %c0_20 = arith.constant 0 : index
    %c0_21 = arith.constant 0 : index
    %38 = vector.load %arg7[%c0_20, %c0_21] : memref<32x32xbf16, #tpu.memory_space<vmem>>, vector<32x32xbf16>
    %cst_22 = arith.constant dense<0.000000e+00> : vector<8x32xf32>
    %39 = tpu.matmul %32, %38, %cst_22 {dimension_numbers = #tpu.dot_dimension_numbers<[1], [0], [0], [1], [0, 0, 1, 1], [], []>} : vector<8x32xbf16>, vector<32x32xbf16>, vector<8x32xf32> -> vector<8x32xf32>
    %c0_23 = arith.constant 0 : index
    %c0_24 = arith.constant 0 : index
    %40 = vector.load %arg8[%c0_23, %c0_24] : memref<1x32xf32, #tpu.memory_space<vmem>>, vector<1x32xf32>
    %41 = vector.broadcast %40 : vector<1x32xf32> to vector<8x32xf32>
    %42 = arith.addf %39, %41 : vector<8x32xf32>
    %c0_25 = arith.constant 0 : index
    %c0_26 = arith.constant 0 : index
    %43 = vector.load %arg9[%c0_25, %c0_26] : memref<32x32xbf16, #tpu.memory_space<vmem>>, vector<32x32xbf16>
    %cst_27 = arith.constant dense<0.000000e+00> : vector<8x32xf32>
    %44 = tpu.matmul %32, %43, %cst_27 {dimension_numbers = #tpu.dot_dimension_numbers<[1], [0], [0], [1], [0, 0, 1, 1], [], []>} : vector<8x32xbf16>, vector<32x32xbf16>, vector<8x32xf32> -> vector<8x32xf32>
    %c0_28 = arith.constant 0 : index
    %c0_29 = arith.constant 0 : index
    %45 = vector.load %arg10[%c0_28, %c0_29] : memref<1x32xf32, #tpu.memory_space<vmem>>, vector<1x32xf32>
    %46 = vector.broadcast %45 : vector<1x32xf32> to vector<8x32xf32>
    %47 = arith.addf %44, %46 : vector<8x32xf32>
    %cst_30 = arith.constant 0.353553385 : f32
    %48 = vector.broadcast %cst_30 : f32 to vector<8x32xf32>
    %49 = arith.mulf %37, %48 : vector<8x32xf32>
    %50 = arith.truncf %49 : vector<8x32xf32> to vector<8x32xbf16>
    %51 = arith.truncf %42 : vector<8x32xf32> to vector<8x32xbf16>
    %52 = arith.truncf %47 : vector<8x32xf32> to vector<8x32xbf16>
    %c0_31 = arith.constant 0 : index
    %c0_32 = arith.constant 0 : index
    %53 = vector.load %arg11[%c0_31, %c0_32] : memref<32x32xbf16, #tpu.memory_space<vmem>>, vector<32x32xbf16>
    %cst_33 = arith.constant 0.000000e+00 : f32
    %54 = vector.broadcast %cst_33 : f32 to vector<8x32xf32>
    %55 = vector.extract_strided_slice %50 {offsets = [0, 0], sizes = [8, 8], strides = [1, 1]} : vector<8x32xbf16> to vector<8x8xbf16>
    %56 = vector.extract_strided_slice %51 {offsets = [0, 0], sizes = [8, 8], strides = [1, 1]} : vector<8x32xbf16> to vector<8x8xbf16>
    %57 = vector.extract_strided_slice %52 {offsets = [0, 0], sizes = [8, 8], strides = [1, 1]} : vector<8x32xbf16> to vector<8x8xbf16>
    %cst_34 = arith.constant dense<0.000000e+00> : vector<8x8xf32>
    %58 = tpu.matmul %55, %56, %cst_34 {dimension_numbers = #tpu.dot_dimension_numbers<[1], [1], [0], [0], [0, 0, 1, 0], [], []>} : vector<8x8xbf16>, vector<8x8xbf16>, vector<8x8xf32> -> vector<8x8xf32>
    %59 = arith.addf %58, %7 : vector<8x8xf32>
    %cst_35 = arith.constant dense<0xFF800000> : vector<8xf32>
    %60 = vector.multi_reduction <maximumf>, %59, %cst_35 [1] : vector<8x8xf32> to vector<8xf32>
    %61 = vector.shape_cast %60 : vector<8xf32> to vector<8x1xf32>
    %62 = vector.broadcast %61 : vector<8x1xf32> to vector<8x8xf32>
    %63 = arith.subf %59, %62 : vector<8x8xf32>
    %64 = math.exp %63 : vector<8x8xf32>
    %cst_36 = arith.constant dense<0.000000e+00> : vector<8xf32>
    %65 = vector.multi_reduction <add>, %64, %cst_36 [1] : vector<8x8xf32> to vector<8xf32>
    %66 = vector.shape_cast %65 : vector<8xf32> to vector<8x1xf32>
    %67 = tpu.reciprocal %66 {approx = true} : vector<8x1xf32> -> vector<8x1xf32>
    %68 = vector.broadcast %67 : vector<8x1xf32> to vector<8x8xf32>
    %69 = arith.mulf %64, %68 : vector<8x8xf32>
    %70 = arith.truncf %69 : vector<8x8xf32> to vector<8x8xbf16>
    %cst_37 = arith.constant dense<0.000000e+00> : vector<8x8xf32>
    %71 = tpu.matmul %70, %57, %cst_37 {dimension_numbers = #tpu.dot_dimension_numbers<[1], [0], [0], [1], [0, 0, 1, 1], [], []>} : vector<8x8xbf16>, vector<8x8xbf16>, vector<8x8xf32> -> vector<8x8xf32>
    %72 = arith.truncf %71 : vector<8x8xf32> to vector<8x8xbf16>
    %73 = vector.extract_strided_slice %53 {offsets = [0, 0], sizes = [8, 32], strides = [1, 1]} : vector<32x32xbf16> to vector<8x32xbf16>
    %cst_38 = arith.constant dense<0.000000e+00> : vector<8x32xf32>
    %74 = tpu.matmul %72, %73, %cst_38 {dimension_numbers = #tpu.dot_dimension_numbers<[1], [0], [0], [1], [0, 0, 1, 1], [], []>} : vector<8x8xbf16>, vector<8x32xbf16>, vector<8x32xf32> -> vector<8x32xf32>
    %75 = arith.addf %54, %74 : vector<8x32xf32>
    %76 = vector.extract_strided_slice %50 {offsets = [0, 8], sizes = [8, 8], strides = [1, 1]} : vector<8x32xbf16> to vector<8x8xbf16>
    %77 = vector.extract_strided_slice %51 {offsets = [0, 8], sizes = [8, 8], strides = [1, 1]} : vector<8x32xbf16> to vector<8x8xbf16>
    %78 = vector.extract_strided_slice %52 {offsets = [0, 8], sizes = [8, 8], strides = [1, 1]} : vector<8x32xbf16> to vector<8x8xbf16>
    %cst_39 = arith.constant dense<0.000000e+00> : vector<8x8xf32>
    %79 = tpu.matmul %76, %77, %cst_39 {dimension_numbers = #tpu.dot_dimension_numbers<[1], [1], [0], [0], [0, 0, 1, 0], [], []>} : vector<8x8xbf16>, vector<8x8xbf16>, vector<8x8xf32> -> vector<8x8xf32>
    %80 = arith.addf %79, %7 : vector<8x8xf32>
    %cst_40 = arith.constant dense<0xFF800000> : vector<8xf32>
    %81 = vector.multi_reduction <maximumf>, %80, %cst_40 [1] : vector<8x8xf32> to vector<8xf32>
    %82 = vector.shape_cast %81 : vector<8xf32> to vector<8x1xf32>
    %83 = vector.broadcast %82 : vector<8x1xf32> to vector<8x8xf32>
    %84 = arith.subf %80, %83 : vector<8x8xf32>
    %85 = math.exp %84 : vector<8x8xf32>
    %cst_41 = arith.constant dense<0.000000e+00> : vector<8xf32>
    %86 = vector.multi_reduction <add>, %85, %cst_41 [1] : vector<8x8xf32> to vector<8xf32>
    %87 = vector.shape_cast %86 : vector<8xf32> to vector<8x1xf32>
    %88 = tpu.reciprocal %87 {approx = true} : vector<8x1xf32> -> vector<8x1xf32>
    %89 = vector.broadcast %88 : vector<8x1xf32> to vector<8x8xf32>
    %90 = arith.mulf %85, %89 : vector<8x8xf32>
    %91 = arith.truncf %90 : vector<8x8xf32> to vector<8x8xbf16>
    %cst_42 = arith.constant dense<0.000000e+00> : vector<8x8xf32>
    %92 = tpu.matmul %91, %78, %cst_42 {dimension_numbers = #tpu.dot_dimension_numbers<[1], [0], [0], [1], [0, 0, 1, 1], [], []>} : vector<8x8xbf16>, vector<8x8xbf16>, vector<8x8xf32> -> vector<8x8xf32>
    %93 = arith.truncf %92 : vector<8x8xf32> to vector<8x8xbf16>
    %94 = vector.extract_strided_slice %53 {offsets = [8, 0], sizes = [8, 32], strides = [1, 1]} : vector<32x32xbf16> to vector<8x32xbf16>
    %cst_43 = arith.constant dense<0.000000e+00> : vector<8x32xf32>
    %95 = tpu.matmul %93, %94, %cst_43 {dimension_numbers = #tpu.dot_dimension_numbers<[1], [0], [0], [1], [0, 0, 1, 1], [], []>} : vector<8x8xbf16>, vector<8x32xbf16>, vector<8x32xf32> -> vector<8x32xf32>
    %96 = arith.addf %75, %95 : vector<8x32xf32>
    %97 = vector.extract_strided_slice %50 {offsets = [0, 16], sizes = [8, 8], strides = [1, 1]} : vector<8x32xbf16> to vector<8x8xbf16>
    %98 = vector.extract_strided_slice %51 {offsets = [0, 16], sizes = [8, 8], strides = [1, 1]} : vector<8x32xbf16> to vector<8x8xbf16>
    %99 = vector.extract_strided_slice %52 {offsets = [0, 16], sizes = [8, 8], strides = [1, 1]} : vector<8x32xbf16> to vector<8x8xbf16>
    %cst_44 = arith.constant dense<0.000000e+00> : vector<8x8xf32>
    %100 = tpu.matmul %97, %98, %cst_44 {dimension_numbers = #tpu.dot_dimension_numbers<[1], [1], [0], [0], [0, 0, 1, 0], [], []>} : vector<8x8xbf16>, vector<8x8xbf16>, vector<8x8xf32> -> vector<8x8xf32>
    %101 = arith.addf %100, %7 : vector<8x8xf32>
    %cst_45 = arith.constant dense<0xFF800000> : vector<8xf32>
    %102 = vector.multi_reduction <maximumf>, %101, %cst_45 [1] : vector<8x8xf32> to vector<8xf32>
    %103 = vector.shape_cast %102 : vector<8xf32> to vector<8x1xf32>
    %104 = vector.broadcast %103 : vector<8x1xf32> to vector<8x8xf32>
    %105 = arith.subf %101, %104 : vector<8x8xf32>
    %106 = math.exp %105 : vector<8x8xf32>
    %cst_46 = arith.constant dense<0.000000e+00> : vector<8xf32>
    %107 = vector.multi_reduction <add>, %106, %cst_46 [1] : vector<8x8xf32> to vector<8xf32>
    %108 = vector.shape_cast %107 : vector<8xf32> to vector<8x1xf32>
    %109 = tpu.reciprocal %108 {approx = true} : vector<8x1xf32> -> vector<8x1xf32>
    %110 = vector.broadcast %109 : vector<8x1xf32> to vector<8x8xf32>
    %111 = arith.mulf %106, %110 : vector<8x8xf32>
    %112 = arith.truncf %111 : vector<8x8xf32> to vector<8x8xbf16>
    %cst_47 = arith.constant dense<0.000000e+00> : vector<8x8xf32>
    %113 = tpu.matmul %112, %99, %cst_47 {dimension_numbers = #tpu.dot_dimension_numbers<[1], [0], [0], [1], [0, 0, 1, 1], [], []>} : vector<8x8xbf16>, vector<8x8xbf16>, vector<8x8xf32> -> vector<8x8xf32>
    %114 = arith.truncf %113 : vector<8x8xf32> to vector<8x8xbf16>
    %115 = vector.extract_strided_slice %53 {offsets = [16, 0], sizes = [8, 32], strides = [1, 1]} : vector<32x32xbf16> to vector<8x32xbf16>
    %cst_48 = arith.constant dense<0.000000e+00> : vector<8x32xf32>
    %116 = tpu.matmul %114, %115, %cst_48 {dimension_numbers = #tpu.dot_dimension_numbers<[1], [0], [0], [1], [0, 0, 1, 1], [], []>} : vector<8x8xbf16>, vector<8x32xbf16>, vector<8x32xf32> -> vector<8x32xf32>
    %117 = arith.addf %96, %116 : vector<8x32xf32>
    %118 = vector.extract_strided_slice %50 {offsets = [0, 24], sizes = [8, 8], strides = [1, 1]} : vector<8x32xbf16> to vector<8x8xbf16>
    %119 = vector.extract_strided_slice %51 {offsets = [0, 24], sizes = [8, 8], strides = [1, 1]} : vector<8x32xbf16> to vector<8x8xbf16>
    %120 = vector.extract_strided_slice %52 {offsets = [0, 24], sizes = [8, 8], strides = [1, 1]} : vector<8x32xbf16> to vector<8x8xbf16>
    %cst_49 = arith.constant dense<0.000000e+00> : vector<8x8xf32>
    %121 = tpu.matmul %118, %119, %cst_49 {dimension_numbers = #tpu.dot_dimension_numbers<[1], [1], [0], [0], [0, 0, 1, 0], [], []>} : vector<8x8xbf16>, vector<8x8xbf16>, vector<8x8xf32> -> vector<8x8xf32>
    %122 = arith.addf %121, %7 : vector<8x8xf32>
    %cst_50 = arith.constant dense<0xFF800000> : vector<8xf32>
    %123 = vector.multi_reduction <maximumf>, %122, %cst_50 [1] : vector<8x8xf32> to vector<8xf32>
    %124 = vector.shape_cast %123 : vector<8xf32> to vector<8x1xf32>
    %125 = vector.broadcast %124 : vector<8x1xf32> to vector<8x8xf32>
    %126 = arith.subf %122, %125 : vector<8x8xf32>
    %127 = math.exp %126 : vector<8x8xf32>
    %cst_51 = arith.constant dense<0.000000e+00> : vector<8xf32>
    %128 = vector.multi_reduction <add>, %127, %cst_51 [1] : vector<8x8xf32> to vector<8xf32>
    %129 = vector.shape_cast %128 : vector<8xf32> to vector<8x1xf32>
    %130 = tpu.reciprocal %129 {approx = true} : vector<8x1xf32> -> vector<8x1xf32>
    %131 = vector.broadcast %130 : vector<8x1xf32> to vector<8x8xf32>
    %132 = arith.mulf %127, %131 : vector<8x8xf32>
    %133 = arith.truncf %132 : vector<8x8xf32> to vector<8x8xbf16>
    %cst_52 = arith.constant dense<0.000000e+00> : vector<8x8xf32>
    %134 = tpu.matmul %133, %120, %cst_52 {dimension_numbers = #tpu.dot_dimension_numbers<[1], [0], [0], [1], [0, 0, 1, 1], [], []>} : vector<8x8xbf16>, vector<8x8xbf16>, vector<8x8xf32> -> vector<8x8xf32>
    %135 = arith.truncf %134 : vector<8x8xf32> to vector<8x8xbf16>
    %136 = vector.extract_strided_slice %53 {offsets = [24, 0], sizes = [8, 32], strides = [1, 1]} : vector<32x32xbf16> to vector<8x32xbf16>
    %cst_53 = arith.constant dense<0.000000e+00> : vector<8x32xf32>
    %137 = tpu.matmul %135, %136, %cst_53 {dimension_numbers = #tpu.dot_dimension_numbers<[1], [0], [0], [1], [0, 0, 1, 1], [], []>} : vector<8x8xbf16>, vector<8x32xbf16>, vector<8x32xf32> -> vector<8x32xf32>
    %138 = arith.addf %117, %137 : vector<8x32xf32>
    %c0_54 = arith.constant 0 : index
    %c0_55 = arith.constant 0 : index
    %139 = vector.load %arg12[%c0_54, %c0_55] : memref<1x32xf32, #tpu.memory_space<vmem>>, vector<1x32xf32>
    %140 = vector.broadcast %139 : vector<1x32xf32> to vector<8x32xf32>
    %141 = arith.addf %138, %140 : vector<8x32xf32>
    %142 = arith.addf %1, %141 : vector<8x32xf32>
    %c0_56 = arith.constant 0 : index
    %c0_57 = arith.constant 0 : index
    %143 = vector.load %arg13[%c0_56, %c0_57] : memref<1x32xf32, #tpu.memory_space<vmem>>, vector<1x32xf32>
    %c0_58 = arith.constant 0 : index
    %c0_59 = arith.constant 0 : index
    %144 = vector.load %arg14[%c0_58, %c0_59] : memref<1x32xf32, #tpu.memory_space<vmem>>, vector<1x32xf32>
    %cst_60 = arith.constant dense<0.000000e+00> : vector<8xf32>
    %145 = vector.multi_reduction <add>, %142, %cst_60 [1] : vector<8x32xf32> to vector<8xf32>
    %146 = vector.shape_cast %145 : vector<8xf32> to vector<8x1xf32>
    %cst_61 = arith.constant 3.200000e+01 : f32
    %147 = vector.broadcast %cst_61 : f32 to vector<8x1xf32>
    %148 = arith.divf %146, %147 : vector<8x1xf32>
    %149 = vector.broadcast %148 : vector<8x1xf32> to vector<8x32xf32>
    %150 = arith.subf %142, %149 : vector<8x32xf32>
    %151 = arith.mulf %150, %150 : vector<8x32xf32>
    %cst_62 = arith.constant dense<0.000000e+00> : vector<8xf32>
    %152 = vector.multi_reduction <add>, %151, %cst_62 [1] : vector<8x32xf32> to vector<8xf32>
    %153 = vector.shape_cast %152 : vector<8xf32> to vector<8x1xf32>
    %cst_63 = arith.constant 3.200000e+01 : f32
    %154 = vector.broadcast %cst_63 : f32 to vector<8x1xf32>
    %155 = arith.divf %153, %154 : vector<8x1xf32>
    %156 = vector.broadcast %148 : vector<8x1xf32> to vector<8x32xf32>
    %157 = arith.subf %142, %156 : vector<8x32xf32>
    %cst_64 = arith.constant 9.99999974E-6 : f32
    %158 = vector.broadcast %cst_64 : f32 to vector<8x1xf32>
    %159 = arith.addf %155, %158 : vector<8x1xf32>
    %160 = math.rsqrt %159 : vector<8x1xf32>
    %161 = vector.broadcast %160 : vector<8x1xf32> to vector<8x32xf32>
    %162 = arith.mulf %157, %161 : vector<8x32xf32>
    %163 = vector.broadcast %143 : vector<1x32xf32> to vector<8x32xf32>
    %164 = arith.mulf %162, %163 : vector<8x32xf32>
    %165 = vector.broadcast %144 : vector<1x32xf32> to vector<8x32xf32>
    %166 = arith.addf %164, %165 : vector<8x32xf32>
    %167 = arith.truncf %166 : vector<8x32xf32> to vector<8x32xbf16>
    %c0_65 = arith.constant 0 : index
    %c0_66 = arith.constant 0 : index
    %168 = vector.load %arg15[%c0_65, %c0_66] : memref<32x64xbf16, #tpu.memory_space<vmem>>, vector<32x64xbf16>
    %cst_67 = arith.constant dense<0.000000e+00> : vector<8x64xf32>
    %169 = tpu.matmul %167, %168, %cst_67 {dimension_numbers = #tpu.dot_dimension_numbers<[1], [0], [0], [1], [0, 0, 1, 1], [], []>} : vector<8x32xbf16>, vector<32x64xbf16>, vector<8x64xf32> -> vector<8x64xf32>
    %c0_68 = arith.constant 0 : index
    %c0_69 = arith.constant 0 : index
    %170 = vector.load %arg16[%c0_68, %c0_69] : memref<1x64xf32, #tpu.memory_space<vmem>>, vector<1x64xf32>
    %171 = vector.broadcast %170 : vector<1x64xf32> to vector<8x64xf32>
    %172 = arith.addf %169, %171 : vector<8x64xf32>
    %173 = arith.mulf %172, %172 : vector<8x64xf32>
    %174 = arith.mulf %172, %173 : vector<8x64xf32>
    %cst_70 = arith.constant 4.471500e-02 : f32
    %175 = vector.broadcast %cst_70 : f32 to vector<8x64xf32>
    %176 = arith.mulf %175, %174 : vector<8x64xf32>
    %177 = arith.addf %172, %176 : vector<8x64xf32>
    %cst_71 = arith.constant 0.797884583 : f32
    %178 = vector.broadcast %cst_71 : f32 to vector<8x64xf32>
    %179 = arith.mulf %178, %177 : vector<8x64xf32>
    %180 = math.tanh %179 : vector<8x64xf32>
    %cst_72 = arith.constant 1.000000e+00 : f32
    %181 = vector.broadcast %cst_72 : f32 to vector<8x64xf32>
    %182 = arith.addf %181, %180 : vector<8x64xf32>
    %cst_73 = arith.constant 5.000000e-01 : f32
    %183 = vector.broadcast %cst_73 : f32 to vector<8x64xf32>
    %184 = arith.mulf %183, %182 : vector<8x64xf32>
    %185 = arith.mulf %172, %184 : vector<8x64xf32>
    %186 = arith.truncf %185 : vector<8x64xf32> to vector<8x64xbf16>
    %c0_74 = arith.constant 0 : index
    %c0_75 = arith.constant 0 : index
    %187 = vector.load %arg17[%c0_74, %c0_75] : memref<64x32xbf16, #tpu.memory_space<vmem>>, vector<64x32xbf16>
    %cst_76 = arith.constant dense<0.000000e+00> : vector<8x32xf32>
    %188 = tpu.matmul %186, %187, %cst_76 {dimension_numbers = #tpu.dot_dimension_numbers<[1], [0], [0], [1], [0, 0, 1, 1], [], []>} : vector<8x64xbf16>, vector<64x32xbf16>, vector<8x32xf32> -> vector<8x32xf32>
    %c0_77 = arith.constant 0 : index
    %c0_78 = arith.constant 0 : index
    %189 = vector.load %arg18[%c0_77, %c0_78] : memref<1x32xf32, #tpu.memory_space<vmem>>, vector<1x32xf32>
    %190 = vector.broadcast %189 : vector<1x32xf32> to vector<8x32xf32>
    %191 = arith.addf %188, %190 : vector<8x32xf32>
    %192 = arith.addf %142, %191 : vector<8x32xf32>
    %c0_79 = arith.constant 0 : index
    %c0_80 = arith.constant 0 : index
    %c0_81 = arith.constant 0 : index
    %193 = vector.load %arg19[%c0_79, %c0_80, %c0_81] : memref<1x8x32xf32, #tpu.memory_space<vmem>>, vector<1x8x32xf32>
    %194 = vector.shape_cast %193 : vector<1x8x32xf32> to vector<8x32xf32>
    %195 = vector.shape_cast %192 : vector<8x32xf32> to vector<1x8x32xf32>
    tpu.vector_store %arg19[%c0_79, %c0_80, %c0_81], %195 {strides = array<i32>} : memref<1x8x32xf32, #tpu.memory_space<vmem>>, vector<1x8x32xf32>,
    return
  }
  func.func @transform_0(%arg0: i32) -> (i32, i32, i32) {
    %c0_i32 = arith.constant 0 : i32
    %c0_i32_0 = arith.constant 0 : i32
    %c0_i32_1 = arith.constant 0 : i32
    return %arg0, %c0_i32, %c0_i32_0 : i32, i32, i32
  }
  func.func @transform_1(%arg0: i32) -> (i32, i32) {
    %c0_i32 = arith.constant 0 : i32
    %c0_i32_0 = arith.constant 0 : i32
    %c0_i32_1 = arith.constant 0 : i32
    return %c0_i32, %c0_i32_0 : i32, i32
  }
  func.func @transform_2(%arg0: i32) -> (i32, i32) {
    %c0_i32 = arith.constant 0 : i32
    %c0_i32_0 = arith.constant 0 : i32
    %c0_i32_1 = arith.constant 0 : i32
    return %c0_i32, %c0_i32_0 : i32, i32
  }
  func.func @transform_3(%arg0: i32) -> (i32, i32) {
    %c0_i32 = arith.constant 0 : i32
    %c0_i32_0 = arith.constant 0 : i32
    %c0_i32_1 = arith.constant 0 : i32
    return %c0_i32, %c0_i32_0 : i32, i32
  }
  func.func @transform_4(%arg0: i32) -> (i32, i32) {
    %c0_i32 = arith.constant 0 : i32
    %c0_i32_0 = arith.constant 0 : i32
    %c0_i32_1 = arith.constant 0 : i32
    return %c0_i32, %c0_i32_0 : i32, i32
  }
  func.func @transform_5(%arg0: i32) -> (i32, i32) {
    %c0_i32 = arith.constant 0 : i32
    %c0_i32_0 = arith.constant 0 : i32
    %c0_i32_1 = arith.constant 0 : i32
    return %c0_i32, %c0_i32_0 : i32, i32
  }
  func.func @transform_6(%arg0: i32) -> (i32, i32) {
    %c0_i32 = arith.constant 0 : i32
    %c0_i32_0 = arith.constant 0 : i32
    %c0_i32_1 = arith.constant 0 : i32
    return %c0_i32, %c0_i32_0 : i32, i32
  }
  func.func @transform_7(%arg0: i32) -> (i32, i32) {
    %c0_i32 = arith.constant 0 : i32
    %c0_i32_0 = arith.constant 0 : i32
    %c0_i32_1 = arith.constant 0 : i32
    return %c0_i32, %c0_i32_0 : i32, i32
  }
  func.func @transform_8(%arg0: i32) -> (i32, i32) {
    %c0_i32 = arith.constant 0 : i32
    %c0_i32_0 = arith.constant 0 : i32
    %c0_i32_1 = arith.constant 0 : i32
    return %c0_i32, %c0_i32_0 : i32, i32
  }
  func.func @transform_9(%arg0: i32) -> (i32, i32) {
    %c0_i32 = arith.constant 0 : i32
    %c0_i32_0 = arith.constant 0 : i32
    %c0_i32_1 = arith.constant 0 : i32
    return %c0_i32, %c0_i32_0 : i32, i32
  }
  func.func @transform_10(%arg0: i32) -> (i32, i32) {
    %c0_i32 = arith.constant 0 : i32
    %c0_i32_0 = arith.constant 0 : i32
    %c0_i32_1 = arith.constant 0 : i32
    return %c0_i32, %c0_i32_0 : i32, i32
  }
  func.func @transform_11(%arg0: i32) -> (i32, i32) {
    %c0_i32 = arith.constant 0 : i32
    %c0_i32_0 = arith.constant 0 : i32
    %c0_i32_1 = arith.constant 0 : i32
    return %c0_i32, %c0_i32_0 : i32, i32
  }
  func.func @transform_12(%arg0: i32) -> (i32, i32) {
    %c0_i32 = arith.constant 0 : i32
    %c0_i32_0 = arith.constant 0 : i32
    %c0_i32_1 = arith.constant 0 : i32
    return %c0_i32, %c0_i32_0 : i32, i32
  }
  func.func @transform_13(%arg0: i32) -> (i32, i32) {
    %c0_i32 = arith.constant 0 : i32
    %c0_i32_0 = arith.constant 0 : i32
    %c0_i32_1 = arith.constant 0 : i32
    return %c0_i32, %c0_i32_0 : i32, i32
  }
  func.func @transform_14(%arg0: i32) -> (i32, i32) {
    %c0_i32 = arith.constant 0 : i32
    %c0_i32_0 = arith.constant 0 : i32
    %c0_i32_1 = arith.constant 0 : i32
    return %c0_i32, %c0_i32_0 : i32, i32
  }
  func.func @transform_15(%arg0: i32) -> (i32, i32) {
    %c0_i32 = arith.constant 0 : i32
    %c0_i32_0 = arith.constant 0 : i32
    %c0_i32_1 = arith.constant 0 : i32
    return %c0_i32, %c0_i32_0 : i32, i32
  }
  func.func @transform_16(%arg0: i32) -> (i32, i32) {
    %c0_i32 = arith.constant 0 : i32
    %c0_i32_0 = arith.constant 0 : i32
    %c0_i32_1 = arith.constant 0 : i32
    return %c0_i32, %c0_i32_0 : i32, i32
  }
  func.func @transform_17(%arg0: i32) -> (i32, i32) {
    %c0_i32 = arith.constant 0 : i32
    %c0_i32_0 = arith.constant 0 : i32
    %c0_i32_1 = arith.constant 0 : i32
    return %c0_i32, %c0_i32_0 : i32, i32
  }
  func.func @transform_18(%arg0: i32) -> (i32, i32, i32) {
    %c0_i32 = arith.constant 0 : i32
    %c0_i32_0 = arith.constant 0 : i32
    %c0_i32_1 = arith.constant 0 : i32
    return %arg0, %c0_i32, %c0_i32_0 : i32, i32, i32
  }
}

</mosaic_0001>

<llo_original>
// kernel: tpu_custom_call.1
$region0: #{tpu_custom_call.1}
  #allocation0 [shape = 'u32[]', space=smem, size = 0x4, offset = 0x4, fixed_abs, tag = 'smem constant byte address 0x4 - core index']
  #allocation1 [shape = 'u32[144,128]{1,0:T(1,128)}', space=vmem, size = 0x12000, scoped, tag = 'internal scratch']
  %s0 = inlined_call_operand.vmem [shape: f32[2,8,32], index: 0, kind: input, shape index: {}]
  %s1 = inlined_call_operand.hbm [shape: f32[8,8], index: 1, kind: input, shape index: {}]
  %s2 = inlined_call_operand.vmem [shape: f32[1,32], index: 2, kind: input, shape index: {}]
  %s3 = inlined_call_operand.vmem [shape: f32[1,32], index: 3, kind: input, shape index: {}]
  %s4 = inlined_call_operand.vmem [shape: bf16[32,32], index: 4, kind: input, shape index: {}]
  %s5 = inlined_call_operand.vmem [shape: f32[1,32], index: 5, kind: input, shape index: {}]
  %s6 = inlined_call_operand.vmem [shape: bf16[32,32], index: 6, kind: input, shape index: {}]
  %s7 = inlined_call_operand.vmem [shape: f32[1,32], index: 7, kind: input, shape index: {}]
  %s8 = inlined_call_operand.hbm [shape: bf16[32,32], index: 8, kind: input, shape index: {}]
  %s9 = inlined_call_operand.vmem [shape: f32[1,32], index: 9, kind: input, shape index: {}]
  %s10 = inlined_call_operand.hbm [shape: bf16[32,32], index: 10, kind: input, shape index: {}]
  %s11 = inlined_call_operand.vmem [shape: f32[1,32], index: 11, kind: input, shape index: {}]
  %s12 = inlined_call_operand.vmem [shape: f32[1,32], index: 12, kind: input, shape index: {}]
  %s13 = inlined_call_operand.vmem [shape: f32[1,32], index: 13, kind: input, shape index: {}]
  %s14 = inlined_call_operand.hbm [shape: bf16[32,64], index: 14, kind: input, shape index: {}]
  %s15 = inlined_call_operand.vmem [shape: f32[1,64], index: 15, kind: input, shape index: {}]
  %s16 = inlined_call_operand.vmem [shape: bf16[64,32], index: 16, kind: input, shape index: {}]
  %s17 = inlined_call_operand.vmem [shape: f32[1,32], index: 17, kind: input, shape index: {}]
  %s18 = inlined_call_operand.hbm [shape: f32[2,8,32], index: 18, kind: output, shape index: {}]
  %s19 = sld [smem:[#allocation0]]
  $region121: #{tpu_custom_call.1} parent=0
    _
  %s21 = ssub.s32 1, %s19
  %s22 = scalar_select 0, %s21, %s19
  $region1: #{tpu_custom_call.1} parent=0
    #allocation2 [shape = 'u8[4096]{0}', space=vmem, size = 0x1000, scoped, tag = 'input window, operand 1, single buffered']
    #allocation3 [shape = 's32[2]{0}', space=sflag, size = 0x8, scoped, tag = 'scoped memory for tpu_custom_call.1']
    #allocation4 [shape = 's32[2]{0}', space=sflag, size = 0x8, scoped, tag = 'scoped memory for tpu_custom_call.1']
    #allocation5 [shape = 'u8[8192]{0}', space=vmem, size = 0x2000, scoped, tag = 'input window, operand 8, single buffered']
    #allocation6 [shape = 's32[1]{0}', space=sflag, size = 0x4, scoped, tag = 'scoped memory for tpu_custom_call.1']
    #allocation7 [shape = 'u8[8192]{0}', space=vmem, size = 0x2000, scoped, tag = 'input window, operand 10, single buffered']
    #allocation8 [shape = 'u8[8192]{0}', space=vmem, size = 0x2000, scoped, tag = 'input window, operand 14, single buffered']
    #allocation9 [shape = 's32[1]{0}', space=sflag, size = 0x4, scoped, tag = 'scoped memory for tpu_custom_call.1']
    #allocation10 [shape = 'u8[8192]{0}', space=vmem, size = 0x2000, scoped, tag = 'output window, operand 0']
    %23 = vsyncpa [#allocation3], 0
    %24 = vsyncpa [#allocation6], 0
    %25 = vsyncpa [#allocation9], 0
    %26 = vsyncpa [#allocation4], 0
    %s27 = scalar_lea.sflag [#allocation4], 1
    %28 = vsyncpa %s27, 0
    loop: start=0, step=1, limit=4
    $region2: #{tpu_custom_call.1} parent=1 // loop_pre_header
      _
    $region3: #{tpu_custom_call.1} parent=1 // loop_header
      %s30 = sphi 0, %s34
      %p31 = scmp.ge.s32.totalorder %s30, 4
      %s40 = sphi 0, %s42
      %s43 = sphi 0, %s40
      %s44 = sphi 0, %s43
      %s60 = sphi 0, %s44
      %s64 = sphi 0, %s64
      %s66 = sphi 0, %s64
      %s67 = sphi 0, %s66
      %s81 = sphi 0, %s67
      %s85 = sphi 0, %s85
      %s87 = sphi 0, %s85
      %s88 = sphi 0, %s87
      %s102 = sphi 0, %s88
      %s106 = sphi 0, %s106
      %s108 = sphi 0, %s106
      %s109 = sphi 0, %s108
      %s123 = sphi 0, %s109
      %s127 = sphi 0, %s127
      %s129 = sphi 0, %s127
      %s130 = sphi 0, %s129
      %s144 = sphi 0, %s130
      %s148 = sphi 0, %s148
      %s150 = sphi 0, %s148
      %s151 = sphi 0, %s150
      %s165 = sphi 0, %s151
      %s169 = sphi 0, %s169
      %s171 = sphi 0, %s169
      %s172 = sphi 0, %s171
      %s186 = sphi 0, %s172
      %s190 = sphi 0, %s190
      %s192 = sphi 0, %s190
      %s193 = sphi 0, %s192
      %s207 = sphi 0, %s193
      %s211 = sphi 0, %s211
      %s213 = sphi 0, %s211
      %s214 = sphi 0, %s213
      %s228 = sphi 0, %s214
      %s232 = sphi 0, %s232
      %s234 = sphi 0, %s232
      %s235 = sphi 0, %s234
      %s249 = sphi 0, %s235
      %s253 = sphi 0, %s253
      %s255 = sphi 0, %s253
      %s256 = sphi 0, %s255
      %s270 = sphi 0, %s256
      %s274 = sphi 0, %s274
      %s276 = sphi 0, %s274
      %s277 = sphi 0, %s276
      %s291 = sphi 0, %s277
      %s295 = sphi 0, %s295
      %s297 = sphi 0, %s295
      %s298 = sphi 0, %s297
      %s312 = sphi 0, %s298
      %s316 = sphi 0, %s316
      %s318 = sphi 0, %s316
      %s319 = sphi 0, %s318
      %s333 = sphi 0, %s319
      %s337 = sphi 0, %s337
      %s339 = sphi 0, %s337
      %s340 = sphi 0, %s339
      %s354 = sphi 0, %s340
      %s358 = sphi 0, %s358
      %s360 = sphi 0, %s358
      %s361 = sphi 0, %s360
      %s375 = sphi 0, %s361
      %s379 = sphi 0, %s379
      %s381 = sphi 0, %s379
      %s382 = sphi 0, %s381
      %s396 = sphi 0, %s382
      %s400 = sphi 0, %s400
      %s402 = sphi 0, %s400
      %s403 = sphi 0, %s402
      %s417 = sphi 0, %s403
      %s423 = sphi 0, %s425
      %s426 = sphi 0, %s423
      %s427 = sphi 0, %s426
      %s443 = sphi 0, %s427
    $region4: #{tpu_custom_call.1} parent=1 // loop_header_branch
      %33 = sbr.rel (%p31) target = $region8
    $region5: #{tpu_custom_call.1} parent=1 // loop_body
      %s35 = ssub.s32 %s30, 1
      %s36 = ssub.s32 %s30, 2
      %s37 = sadd.s32 %s30, 1
      %s38 = ssub.s32 %s30, %s37
      %p39 = scmp.eq.s32.totalorder %s38, 0
      %s41 = sadd.s32 %s40, 1
      %s42 = scalar_select %p39, %s40, %s41
      %p45 = pneg %p39
      %p46 = scmp.eq.s32.totalorder %s30, 1
      %p47 = por %p45, %p46
      %p48 = scmp.ne.s32.totalorder %s40, %s43
      %p49 = scmp.eq.s32.totalorder %s30, 0
      %p50 = por %p48, %p49
      %p51 = scmp.ne.s32.totalorder %s40, %s43
      %p52 = scmp.eq.s32.totalorder %s35, 1
      %p53 = por %p51, %p52
      %p54 = scmp.ne.s32.totalorder %s43, %s44
      %p55 = scmp.eq.s32.totalorder %s35, 0
      %p56 = por %p54, %p55
      %p57 = scmp.ne.s32.totalorder %s43, %s44
      %p58 = scmp.eq.s32.totalorder %s36, 1
      %p59 = por %p57, %p58
      %p61 = scmp.ne.s32.totalorder %s44, %s60
      %p62 = scmp.eq.s32.totalorder %s36, 0
      %p63 = por %p61, %p62
      %s65 = sadd.s32 %s64, 1
      %p68 = scmp.eq.s32.totalorder %s30, 1
      %p69 = scmp.ne.s32.totalorder %s64, %s66
      %p70 = scmp.eq.s32.totalorder %s30, 0
      %p71 = por %p69, %p70
      %p72 = scmp.ne.s32.totalorder %s64, %s66
      %p73 = scmp.eq.s32.totalorder %s35, 1
      %p74 = por %p72, %p73
      %p75 = scmp.ne.s32.totalorder %s66, %s67
      %p76 = scmp.eq.s32.totalorder %s35, 0
      %p77 = por %p75, %p76
      %p78 = scmp.ne.s32.totalorder %s66, %s67
      %p79 = scmp.eq.s32.totalorder %s36, 1
      %p80 = por %p78, %p79
      %p82 = scmp.ne.s32.totalorder %s67, %s81
      %p83 = scmp.eq.s32.totalorder %s36, 0
      %p84 = por %p82, %p83
      %s86 = sadd.s32 %s85, 1
      %p89 = scmp.eq.s32.totalorder %s30, 1
      %p90 = scmp.ne.s32.totalorder %s85, %s87
      %p91 = scmp.eq.s32.totalorder %s30, 0
      %p92 = por %p90, %p91
      %p93 = scmp.ne.s32.totalorder %s85, %s87
      %p94 = scmp.eq.s32.totalorder %s35, 1
      %p95 = por %p93, %p94
      %p96 = scmp.ne.s32.totalorder %s87, %s88
      %p97 = scmp.eq.s32.totalorder %s35, 0
      %p98 = por %p96, %p97
      %p99 = scmp.ne.s32.totalorder %s87, %s88
      %p100 = scmp.eq.s32.totalorder %s36, 1
      %p101 = por %p99, %p100
      %p103 = scmp.ne.s32.totalorder %s88, %s102
      %p104 = scmp.eq.s32.totalorder %s36, 0
      %p105 = por %p103, %p104
      %s107 = sadd.s32 %s106, 1
      %p110 = scmp.eq.s32.totalorder %s30, 1
      %p111 = scmp.ne.s32.totalorder %s106, %s108
      %p112 = scmp.eq.s32.totalorder %s30, 0
      %p113 = por %p111, %p112
      %p114 = scmp.ne.s32.totalorder %s106, %s108
      %p115 = scmp.eq.s32.totalorder %s35, 1
      %p116 = por %p114, %p115
      %p117 = scmp.ne.s32.totalorder %s108, %s109
      %p118 = scmp.eq.s32.totalorder %s35, 0
      %p119 = por %p117, %p118
      %p120 = scmp.ne.s32.totalorder %s108, %s109
      %p121 = scmp.eq.s32.totalorder %s36, 1
      %p122 = por %p120, %p121
      %p124 = scmp.ne.s32.totalorder %s109, %s123
      %p125 = scmp.eq.s32.totalorder %s36, 0
      %p126 = por %p124, %p125
      %s128 = sadd.s32 %s127, 1
      %p131 = scmp.eq.s32.totalorder %s30, 1
      %p132 = scmp.ne.s32.totalorder %s127, %s129
      %p133 = scmp.eq.s32.totalorder %s30, 0
      %p134 = por %p132, %p133
      %p135 = scmp.ne.s32.totalorder %s127, %s129
      %p136 = scmp.eq.s32.totalorder %s35, 1
      %p137 = por %p135, %p136
      %p138 = scmp.ne.s32.totalorder %s129, %s130
      %p139 = scmp.eq.s32.totalorder %s35, 0
      %p140 = por %p138, %p139
      %p141 = scmp.ne.s32.totalorder %s129, %s130
      %p142 = scmp.eq.s32.totalorder %s36, 1
      %p143 = por %p141, %p142
      %p145 = scmp.ne.s32.totalorder %s130, %s144
      %p146 = scmp.eq.s32.totalorder %s36, 0
      %p147 = por %p145, %p146
      %s149 = sadd.s32 %s148, 1
      %p152 = scmp.eq.s32.totalorder %s30, 1
      %p153 = scmp.ne.s32.totalorder %s148, %s150
      %p154 = scmp.eq.s32.totalorder %s30, 0
      %p155 = por %p153, %p154
      %p156 = scmp.ne.s32.totalorder %s148, %s150
      %p157 = scmp.eq.s32.totalorder %s35, 1
      %p158 = por %p156, %p157
      %p159 = scmp.ne.s32.totalorder %s150, %s151
      %p160 = scmp.eq.s32.totalorder %s35, 0
      %p161 = por %p159, %p160
      %p162 = scmp.ne.s32.totalorder %s150, %s151
      %p163 = scmp.eq.s32.totalorder %s36, 1
      %p164 = por %p162, %p163
      %p166 = scmp.ne.s32.totalorder %s151, %s165
      %p167 = scmp.eq.s32.totalorder %s36, 0
      %p168 = por %p166, %p167
      %s170 = sadd.s32 %s169, 1
      %p173 = scmp.eq.s32.totalorder %s30, 1
      %p174 = scmp.ne.s32.totalorder %s169, %s171
      %p175 = scmp.eq.s32.totalorder %s30, 0
      %p176 = por %p174, %p175
      %p177 = scmp.ne.s32.totalorder %s169, %s171
      %p178 = scmp.eq.s32.totalorder %s35, 1
      %p179 = por %p177, %p178
      %p180 = scmp.ne.s32.totalorder %s171, %s172
      %p181 = scmp.eq.s32.totalorder %s35, 0
      %p182 = por %p180, %p181
      %p183 = scmp.ne.s32.totalorder %s171, %s172
      %p184 = scmp.eq.s32.totalorder %s36, 1
      %p185 = por %p183, %p184
      %p187 = scmp.ne.s32.totalorder %s172, %s186
      %p188 = scmp.eq.s32.totalorder %s36, 0
      %p189 = por %p187, %p188
      %s191 = sadd.s32 %s190, 1
      %p194 = scmp.eq.s32.totalorder %s30, 1
      %p195 = scmp.ne.s32.totalorder %s190, %s192
      %p196 = scmp.eq.s32.totalorder %s30, 0
      %p197 = por %p195, %p196
      %p198 = scmp.ne.s32.totalorder %s190, %s192
      %p199 = scmp.eq.s32.totalorder %s35, 1
      %p200 = por %p198, %p199
      %p201 = scmp.ne.s32.totalorder %s192, %s193
      %p202 = scmp.eq.s32.totalorder %s35, 0
      %p203 = por %p201, %p202
      %p204 = scmp.ne.s32.totalorder %s192, %s193
      %p205 = scmp.eq.s32.totalorder %s36, 1
      %p206 = por %p204, %p205
      %p208 = scmp.ne.s32.totalorder %s193, %s207
      %p209 = scmp.eq.s32.totalorder %s36, 0
      %p210 = por %p208, %p209
      %s212 = sadd.s32 %s211, 1
      %p215 = scmp.eq.s32.totalorder %s30, 1
      %p216 = scmp.ne.s32.totalorder %s211, %s213
      %p217 = scmp.eq.s32.totalorder %s30, 0
      %p218 = por %p216, %p217
      %p219 = scmp.ne.s32.totalorder %s211, %s213
      %p220 = scmp.eq.s32.totalorder %s35, 1
      %p221 = por %p219, %p220
      %p222 = scmp.ne.s32.totalorder %s213, %s214
      %p223 = scmp.eq.s32.totalorder %s35, 0
      %p224 = por %p222, %p223
      %p225 = scmp.ne.s32.totalorder %s213, %s214
      %p226 = scmp.eq.s32.totalorder %s36, 1
      %p227 = por %p225, %p226
      %p229 = scmp.ne.s32.totalorder %s214, %s228
      %p230 = scmp.eq.s32.totalorder %s36, 0
      %p231 = por %p229, %p230
      %s233 = sadd.s32 %s232, 1
      %p236 = scmp.eq.s32.totalorder %s30, 1
      %p237 = scmp.ne.s32.totalorder %s232, %s234
      %p238 = scmp.eq.s32.totalorder %s30, 0
      %p239 = por %p237, %p238
      %p240 = scmp.ne.s32.totalorder %s232, %s234
      %p241 = scmp.eq.s32.totalorder %s35, 1
      %p242 = por %p240, %p241
      %p243 = scmp.ne.s32.totalorder %s234, %s235
      %p244 = scmp.eq.s32.totalorder %s35, 0
      %p245 = por %p243, %p244
      %p246 = scmp.ne.s32.totalorder %s234, %s235
      %p247 = scmp.eq.s32.totalorder %s36, 1
      %p248 = por %p246, %p247
      %p250 = scmp.ne.s32.totalorder %s235, %s249
      %p251 = scmp.eq.s32.totalorder %s36, 0
      %p252 = por %p250, %p251
      %s254 = sadd.s32 %s253, 1
      %p257 = scmp.eq.s32.totalorder %s30, 1
      %p258 = scmp.ne.s32.totalorder %s253, %s255
      %p259 = scmp.eq.s32.totalorder %s30, 0
      %p260 = por %p258, %p259
      %p261 = scmp.ne.s32.totalorder %s253, %s255
      %p262 = scmp.eq.s32.totalorder %s35, 1
      %p263 = por %p261, %p262
      %p264 = scmp.ne.s32.totalorder %s255, %s256
      %p265 = scmp.eq.s32.totalorder %s35, 0
      %p266 = por %p264, %p265
      %p267 = scmp.ne.s32.totalorder %s255, %s256
      %p268 = scmp.eq.s32.totalorder %s36, 1
      %p269 = por %p267, %p268
      %p271 = scmp.ne.s32.totalorder %s256, %s270
      %p272 = scmp.eq.s32.totalorder %s36, 0
      %p273 = por %p271, %p272
      %s275 = sadd.s32 %s274, 1
      %p278 = scmp.eq.s32.totalorder %s30, 1
      %p279 = scmp.ne.s32.totalorder %s274, %s276
      %p280 = scmp.eq.s32.totalorder %s30, 0
      %p281 = por %p279, %p280
      %p282 = scmp.ne.s32.totalorder %s274, %s276
      %p283 = scmp.eq.s32.totalorder %s35, 1
      %p284 = por %p282, %p283
      %p285 = scmp.ne.s32.totalorder %s276, %s277
      %p286 = scmp.eq.s32.totalorder %s35, 0
      %p287 = por %p285, %p286
      %p288 = scmp.ne.s32.totalorder %s276, %s277
      %p289 = scmp.eq.s32.totalorder %s36, 1
      %p290 = por %p288, %p289
      %p292 = scmp.ne.s32.totalorder %s277, %s291
      %p293 = scmp.eq.s32.totalorder %s36, 0
      %p294 = por %p292, %p293
      %s296 = sadd.s32 %s295, 1
      %p299 = scmp.eq.s32.totalorder %s30, 1
      %p300 = scmp.ne.s32.totalorder %s295, %s297
      %p301 = scmp.eq.s32.totalorder %s30, 0
      %p302 = por %p300, %p301
      %p303 = scmp.ne.s32.totalorder %s295, %s297
      %p304 = scmp.eq.s32.totalorder %s35, 1
      %p305 = por %p303, %p304
      %p306 = scmp.ne.s32.totalorder %s297, %s298
      %p307 = scmp.eq.s32.totalorder %s35, 0
      %p308 = por %p306, %p307
      %p309 = scmp.ne.s32.totalorder %s297, %s298
      %p310 = scmp.eq.s32.totalorder %s36, 1
      %p311 = por %p309, %p310
      %p313 = scmp.ne.s32.totalorder %s298, %s312
      %p314 = scmp.eq.s32.totalorder %s36, 0
      %p315 = por %p313, %p314
      %s317 = sadd.s32 %s316, 1
      %p320 = scmp.eq.s32.totalorder %s30, 1
      %p321 = scmp.ne.s32.totalorder %s316, %s318
      %p322 = scmp.eq.s32.totalorder %s30, 0
      %p323 = por %p321, %p322
      %p324 = scmp.ne.s32.totalorder %s316, %s318
      %p325 = scmp.eq.s32.totalorder %s35, 1
      %p326 = por %p324, %p325
      %p327 = scmp.ne.s32.totalorder %s318, %s319
      %p328 = scmp.eq.s32.totalorder %s35, 0
      %p329 = por %p327, %p328
      %p330 = scmp.ne.s32.totalorder %s318, %s319
      %p331 = scmp.eq.s32.totalorder %s36, 1
      %p332 = por %p330, %p331
      %p334 = scmp.ne.s32.totalorder %s319, %s333
      %p335 = scmp.eq.s32.totalorder %s36, 0
      %p336 = por %p334, %p335
      %s338 = sadd.s32 %s337, 1
      %p341 = scmp.eq.s32.totalorder %s30, 1
      %p342 = scmp.ne.s32.totalorder %s337, %s339
      %p343 = scmp.eq.s32.totalorder %s30, 0
      %p344 = por %p342, %p343
      %p345 = scmp.ne.s32.totalorder %s337, %s339
      %p346 = scmp.eq.s32.totalorder %s35, 1
      %p347 = por %p345, %p346
      %p348 = scmp.ne.s32.totalorder %s339, %s340
      %p349 = scmp.eq.s32.totalorder %s35, 0
      %p350 = por %p348, %p349
      %p351 = scmp.ne.s32.totalorder %s339, %s340
      %p352 = scmp.eq.s32.totalorder %s36, 1
      %p353 = por %p351, %p352
      %p355 = scmp.ne.s32.totalorder %s340, %s354
      %p356 = scmp.eq.s32.totalorder %s36, 0
      %p357 = por %p355, %p356
      %s359 = sadd.s32 %s358, 1
      %p362 = scmp.eq.s32.totalorder %s30, 1
      %p363 = scmp.ne.s32.totalorder %s358, %s360
      %p364 = scmp.eq.s32.totalorder %s30, 0
      %p365 = por %p363, %p364
      %p366 = scmp.ne.s32.totalorder %s358, %s360
      %p367 = scmp.eq.s32.totalorder %s35, 1
      %p368 = por %p366, %p367
      %p369 = scmp.ne.s32.totalorder %s360, %s361
      %p370 = scmp.eq.s32.totalorder %s35, 0
      %p371 = por %p369, %p370
      %p372 = scmp.ne.s32.totalorder %s360, %s361
      %p373 = scmp.eq.s32.totalorder %s36, 1
      %p374 = por %p372, %p373
      %p376 = scmp.ne.s32.totalorder %s361, %s375
      %p377 = scmp.eq.s32.totalorder %s36, 0
      %p378 = por %p376, %p377
      %s380 = sadd.s32 %s379, 1
      %p383 = scmp.eq.s32.totalorder %s30, 1
      %p384 = scmp.ne.s32.totalorder %s379, %s381
      %p385 = scmp.eq.s32.totalorder %s30, 0
      %p386 = por %p384, %p385
      %p387 = scmp.ne.s32.totalorder %s379, %s381
      %p388 = scmp.eq.s32.totalorder %s35, 1
      %p389 = por %p387, %p388
      %p390 = scmp.ne.s32.totalorder %s381, %s382
      %p391 = scmp.eq.s32.totalorder %s35, 0
      %p392 = por %p390, %p391
      %p393 = scmp.ne.s32.totalorder %s381, %s382
      %p394 = scmp.eq.s32.totalorder %s36, 1
      %p395 = por %p393, %p394
      %p397 = scmp.ne.s32.totalorder %s382, %s396
      %p398 = scmp.eq.s32.totalorder %s36, 0
      %p399 = por %p397, %p398
      %s401 = sadd.s32 %s400, 1
      %p404 = scmp.eq.s32.totalorder %s30, 1
      %p405 = scmp.ne.s32.totalorder %s400, %s402
      %p406 = scmp.eq.s32.totalorder %s30, 0
      %p407 = por %p405, %p406
      %p408 = scmp.ne.s32.totalorder %s400, %s402
      %p409 = scmp.eq.s32.totalorder %s35, 1
      %p410 = por %p408, %p409
      %p411 = scmp.ne.s32.totalorder %s402, %s403
      %p412 = scmp.eq.s32.totalorder %s35, 0
      %p413 = por %p411, %p412
      %p414 = scmp.ne.s32.totalorder %s402, %s403
      %p415 = scmp.eq.s32.totalorder %s36, 1
      %p416 = por %p414, %p415
      %p418 = scmp.ne.s32.totalorder %s403, %s417
      %p419 = scmp.eq.s32.totalorder %s36, 0
      %p420 = por %p418, %p419
      %s421 = ssub.s32 %s30, %s37
      %p422 = scmp.eq.s32.totalorder %s421, 0
      %s424 = sadd.s32 %s423, 1
      %s425 = scalar_select %p422, %s423, %s424
      %p428 = pneg %p422
      %p429 = scmp.eq.s32.totalorder %s30, 1
      %p430 = por %p428, %p429
      %p431 = scmp.ne.s32.totalorder %s423, %s426
      %p432 = scmp.eq.s32.totalorder %s30, 0
      %p433 = por %p431, %p432
      %p434 = scmp.ne.s32.totalorder %s423, %s426
      %p435 = scmp.eq.s32.totalorder %s35, 1
      %p436 = por %p434, %p435
      %p437 = scmp.ne.s32.totalorder %s426, %s427
      %p438 = scmp.eq.s32.totalorder %s35, 0
      %p439 = por %p437, %p438
      %p440 = scmp.ne.s32.totalorder %s426, %s427
      %p441 = scmp.eq.s32.totalorder %s36, 1
      %p442 = por %p440, %p441
      %p444 = scmp.ne.s32.totalorder %s427, %s443
      %p445 = scmp.eq.s32.totalorder %s36, 0
      %p446 = por %p444, %p445
      %p447 = scmp.le.s32.totalorder 1, %s30
      %p448 = scmp.lt.s32.totalorder %s30, 3
      %p449 = pnand %p447, %p448
      %p450 = pneg %p449
      // Predicated region
      $region9: #{tpu_custom_call.1} parent=5 // pred_check
        _
      $region10: #{tpu_custom_call.1} parent=5 // pred_check_branch
        %452 = sbr.rel (%p449) target = $region12
      $region11: #{tpu_custom_call.1} parent=5 // pred_region
        %s453 = ssub.s32 %s30, 1
        // Predicated region
        $region13: #{tpu_custom_call.1} parent=11 // pred_check
          %p454 = pneg %p77
        $region14: #{tpu_custom_call.1} parent=11 // pred_check_branch
          %456 = sbr.rel (%p454) target = $region16
        $region15: #{tpu_custom_call.1} parent=11 // pred_region
          %s458 = ssub.s32 128, 128
          %459 = vsyncadd [#allocation3], %s458
          %s461 = sshll.u32 [#allocation2], 4
          %s462 = int_to_ptr.vmem [resolvable:$true] %s461
          %464 = dma.hbm_to_vmem [thread:$0]  %s1, 128, %s462, [#allocation3]
        $region16: #{tpu_custom_call.1} parent=11 // pred_fallthru
          _
        // Predicated region
        $region17: #{tpu_custom_call.1} parent=11 // pred_check
          %p465 = pneg %p98
        $region18: #{tpu_custom_call.1} parent=11 // pred_check_branch
          %467 = sbr.rel (%p465) target = $region20
        $region19: #{tpu_custom_call.1} parent=11 // pred_region
          _
        $region20: #{tpu_custom_call.1} parent=11 // pred_fallthru
          _
        // Predicated region
        $region21: #{tpu_custom_call.1} parent=11 // pred_check
          %p468 = pneg %p119
        $region22: #{tpu_custom_call.1} parent=11 // pred_check_branch
          %470 = sbr.rel (%p468) target = $region24
        $region23: #{tpu_custom_call.1} parent=11 // pred_region
          _
        $region24: #{tpu_custom_call.1} parent=11 // pred_fallthru
          _
        // Predicated region
        $region25: #{tpu_custom_call.1} parent=11 // pred_check
          %p471 = pneg %p140
        $region26: #{tpu_custom_call.1} parent=11 // pred_check_branch
          %473 = sbr.rel (%p471) target = $region28
        $region27: #{tpu_custom_call.1} parent=11 // pred_region
          _
        $region28: #{tpu_custom_call.1} parent=11 // pred_fallthru
          _
        // Predicated region
        $region29: #{tpu_custom_call.1} parent=11 // pred_check
          %p474 = pneg %p161
        $region30: #{tpu_custom_call.1} parent=11 // pred_check_branch
          %476 = sbr.rel (%p474) target = $region32
        $region31: #{tpu_custom_call.1} parent=11 // pred_region
          _
        $region32: #{tpu_custom_call.1} parent=11 // pred_fallthru
          _
        // Predicated region
        $region33: #{tpu_custom_call.1} parent=11 // pred_check
          %p477 = pneg %p182
        $region34: #{tpu_custom_call.1} parent=11 // pred_check_branch
          %479 = sbr.rel (%p477) target = $region36
        $region35: #{tpu_custom_call.1} parent=11 // pred_region
          _
        $region36: #{tpu_custom_call.1} parent=11 // pred_fallthru
          _
        // Predicated region
        $region37: #{tpu_custom_call.1} parent=11 // pred_check
          %p480 = pneg %p203
        $region38: #{tpu_custom_call.1} parent=11 // pred_check_branch
          %482 = sbr.rel (%p480) target = $region40
        $region39: #{tpu_custom_call.1} parent=11 // pred_region
          _
        $region40: #{tpu_custom_call.1} parent=11 // pred_fallthru
          _
        // Predicated region
        $region41: #{tpu_custom_call.1} parent=11 // pred_check
          %p483 = pneg %p224
        $region42: #{tpu_custom_call.1} parent=11 // pred_check_branch
          %485 = sbr.rel (%p483) target = $region44
        $region43: #{tpu_custom_call.1} parent=11 // pred_region
          %s487 = ssub.s32 256, 256
          %488 = vsyncadd [#allocation6], %s487
          %s489 = sshll.u32 [#allocation5], 4
          %s490 = int_to_ptr.vmem [resolvable:$true] %s489
          %495 = dma.hbm_to_vmem [thread:$0]  %s8, 256, %s490, [#allocation6], 64, 64, 4
        $region44: #{tpu_custom_call.1} parent=11 // pred_fallthru
          _
        // Predicated region
        $region45: #{tpu_custom_call.1} parent=11 // pred_check
          %p496 = pneg %p245
        $region46: #{tpu_custom_call.1} parent=11 // pred_check_branch
          %498 = sbr.rel (%p496) target = $region48
        $region47: #{tpu_custom_call.1} parent=11 // pred_region
          _
        $region48: #{tpu_custom_call.1} parent=11 // pred_fallthru
          _
        // Predicated region
        $region49: #{tpu_custom_call.1} parent=11 // pred_check
          %p499 = pneg %p266
        $region50: #{tpu_custom_call.1} parent=11 // pred_check_branch
          %501 = sbr.rel (%p499) target = $region52
        $region51: #{tpu_custom_call.1} parent=11 // pred_region
          %s503 = ssub.s32 256, 256
          %504 = vsyncadd [#allocation6], %s503
          %s505 = sshll.u32 [#allocation7], 4
          %s506 = int_to_ptr.vmem [resolvable:$true] %s505
          %511 = dma.hbm_to_vmem [thread:$0]  %s10, 256, %s506, [#allocation6], 64, 64, 4
        $region52: #{tpu_custom_call.1} parent=11 // pred_fallthru
          _
        // Predicated region
        $region53: #{tpu_custom_call.1} parent=11 // pred_check
          %p512 = pneg %p287
        $region54: #{tpu_custom_call.1} parent=11 // pred_check_branch
          %514 = sbr.rel (%p512) target = $region56
        $region55: #{tpu_custom_call.1} parent=11 // pred_region
          _
        $region56: #{tpu_custom_call.1} parent=11 // pred_fallthru
          _
        // Predicated region
        $region57: #{tpu_custom_call.1} parent=11 // pred_check
          %p515 = pneg %p308
        $region58: #{tpu_custom_call.1} parent=11 // pred_check_branch
          %517 = sbr.rel (%p515) target = $region60
        $region59: #{tpu_custom_call.1} parent=11 // pred_region
          _
        $region60: #{tpu_custom_call.1} parent=11 // pred_fallthru
          _
        // Predicated region
        $region61: #{tpu_custom_call.1} parent=11 // pred_check
          %p518 = pneg %p329
        $region62: #{tpu_custom_call.1} parent=11 // pred_check_branch
          %520 = sbr.rel (%p518) target = $region64
        $region63: #{tpu_custom_call.1} parent=11 // pred_region
          _
        $region64: #{tpu_custom_call.1} parent=11 // pred_fallthru
          _
        // Predicated region
        $region65: #{tpu_custom_call.1} parent=11 // pred_check
          %p521 = pneg %p350
        $region66: #{tpu_custom_call.1} parent=11 // pred_check_branch
          %523 = sbr.rel (%p521) target = $region68
        $region67: #{tpu_custom_call.1} parent=11 // pred_region
          %s525 = ssub.s32 256, 256
          %526 = vsyncadd [#allocation9], %s525
          %s527 = sshll.u32 [#allocation8], 4
          %s528 = int_to_ptr.vmem [resolvable:$true] %s527
          %533 = dma.hbm_to_vmem [thread:$0]  %s14, 256, %s528, [#allocation9], 64, 64, 4
        $region68: #{tpu_custom_call.1} parent=11 // pred_fallthru
          _
        // Predicated region
        $region69: #{tpu_custom_call.1} parent=11 // pred_check
          %p534 = pneg %p371
        $region70: #{tpu_custom_call.1} parent=11 // pred_check_branch
          %536 = sbr.rel (%p534) target = $region72
        $region71: #{tpu_custom_call.1} parent=11 // pred_region
          _
        $region72: #{tpu_custom_call.1} parent=11 // pred_fallthru
          _
        // Predicated region
        $region73: #{tpu_custom_call.1} parent=11 // pred_check
          %p537 = pneg %p392
        $region74: #{tpu_custom_call.1} parent=11 // pred_check_branch
          %539 = sbr.rel (%p537) target = $region76
        $region75: #{tpu_custom_call.1} parent=11 // pred_region
          _
        $region76: #{tpu_custom_call.1} parent=11 // pred_fallthru
          _
        // Predicated region
        $region77: #{tpu_custom_call.1} parent=11 // pred_check
          %p540 = pneg %p413
        $region78: #{tpu_custom_call.1} parent=11 // pred_check_branch
          %542 = sbr.rel (%p540) target = $region80
        $region79: #{tpu_custom_call.1} parent=11 // pred_region
          _
        $region80: #{tpu_custom_call.1} parent=11 // pred_fallthru
          _
      $region12: #{tpu_custom_call.1} parent=5 // pred_fallthru
        _
      %p543 = scmp.lt.s32.totalorder %s30, 2
      // Predicated region
      $region81: #{tpu_custom_call.1} parent=5 // pred_check
        %p544 = pneg %p543
      $region82: #{tpu_custom_call.1} parent=5 // pred_check_branch
        %546 = sbr.rel (%p544) target = $region84
      $region83: #{tpu_custom_call.1} parent=5 // pred_region
        // Predicated region
        $region85: #{tpu_custom_call.1} parent=83 // pred_check
          %p547 = pneg %p50
        $region86: #{tpu_custom_call.1} parent=83 // pred_check_branch
          %549 = sbr.rel (%p547) target = $region88
        $region87: #{tpu_custom_call.1} parent=83 // pred_region
          %p550 = scmp.lt.s32.totalorder %s30, 1
          %s551 = scalar_select %p550, %s30, 1
          %s552 = smul.addr %s551, 8
          %s553 = scalar_lea.vmem %s0, %s552
        $region88: #{tpu_custom_call.1} parent=83 // pred_fallthru
          _
      $region84: #{tpu_custom_call.1} parent=5 // pred_fallthru
        _
      %p554 = scmp.le.s32.totalorder 1, %s30
      %p555 = scmp.lt.s32.totalorder %s30, 3
      %p556 = pnand %p554, %p555
      %p557 = pneg %p556
      // Predicated region
      $region89: #{tpu_custom_call.1} parent=5 // pred_check
        _
      $region90: #{tpu_custom_call.1} parent=5 // pred_check_branch
        %559 = sbr.rel (%p556) target = $region92
      $region91: #{tpu_custom_call.1} parent=5 // pred_region
        %s560 = ssub.s32 %s30, 1
        // Predicated region
        $region93: #{tpu_custom_call.1} parent=91 // pred_check
          %p561 = pneg %p77
        $region94: #{tpu_custom_call.1} parent=91 // pred_check_branch
          %563 = sbr.rel (%p561) target = $region96
        $region95: #{tpu_custom_call.1} parent=91 // pred_region
          %564 = dma.done [#allocation3], 128
        $region96: #{tpu_custom_call.1} parent=91 // pred_fallthru
          _
        // Predicated region
        $region97: #{tpu_custom_call.1} parent=91 // pred_check
          %p565 = pneg %p224
        $region98: #{tpu_custom_call.1} parent=91 // pred_check_branch
          %567 = sbr.rel (%p565) target = $region100
        $region99: #{tpu_custom_call.1} parent=91 // pred_region
          %568 = dma.done [#allocation6], 256
        $region100: #{tpu_custom_call.1} parent=91 // pred_fallthru
          _
        // Predicated region
        $region101: #{tpu_custom_call.1} parent=91 // pred_check
          %p569 = pneg %p266
        $region102: #{tpu_custom_call.1} parent=91 // pred_check_branch
          %571 = sbr.rel (%p569) target = $region104
        $region103: #{tpu_custom_call.1} parent=91 // pred_region
          %572 = dma.done [#allocation6], 256
        $region104: #{tpu_custom_call.1} parent=91 // pred_fallthru
          _
        // Predicated region
        $region105: #{tpu_custom_call.1} parent=91 // pred_check
          %p573 = pneg %p350
        $region106: #{tpu_custom_call.1} parent=91 // pred_check_branch
          %575 = sbr.rel (%p573) target = $region108
        $region107: #{tpu_custom_call.1} parent=91 // pred_region
          %576 = dma.done [#allocation9], 256
        $region108: #{tpu_custom_call.1} parent=91 // pred_fallthru
          _
        %p577 = scmp.lt.s32.totalorder %s35, 1
        %s578 = scalar_select %p577, %s35, 1
        %s579 = smul.addr %s578, 8
        %s580 = scalar_lea.vmem %s0, %s579
        %p581 = pneg %p56
        %p582 = pneg %p53
        %p583 = pneg %p77
        %p584 = pneg %p74
        %p585 = pneg %p98
        %p586 = pneg %p95
        %p587 = pneg %p119
        %p588 = pneg %p116
        %p589 = pneg %p140
        %p590 = pneg %p137
        %p591 = pneg %p161
        %p592 = pneg %p158
        %p593 = pneg %p182
        %p594 = pneg %p179
        %p595 = pneg %p203
        %p596 = pneg %p200
        %p597 = pneg %p224
        %p598 = pneg %p221
        %p599 = pneg %p245
        %p600 = pneg %p242
        %p601 = pneg %p266
        %p602 = pneg %p263
        %p603 = pneg %p287
        %p604 = pneg %p284
        %p605 = pneg %p308
        %p606 = pneg %p305
        %p607 = pneg %p329
        %p608 = pneg %p326
        %p609 = pneg %p350
        %p610 = pneg %p347
        %p611 = pneg %p371
        %p612 = pneg %p368
        %p613 = pneg %p392
        %p614 = pneg %p389
        %p615 = pneg %p413
        %p616 = pneg %p410
        %p617 = pneg %p439
        %p618 = pneg %p436
        %s619 = sand.u32 %s426, 1
        %s620 = scalar_lea.sflag [#allocation4], %s619
        %s621 = sand.u32 %s426, 1
        %s622 = smul.addr %s621, 8
        %s623 = scalar_lea.vmem [#allocation10], %s622
        %p624 = scmp.lt.s32.totalorder %s35, 1
        %s625 = scalar_select %p624, %s35, 1
        %s626 = smul.addr %s625, 8
        %s627 = scalar_lea.vmem %s0, %s626
        %v629 = vld [vmem:[%s627] sm:$0xff]
        %v630 = vld [vmem:[#allocation2] sm:$0xff]
        %vm631 = vcmp.gt.f32.partialorder %v630, 0.0
        %v632 = vsel %vm631, 0.0, -1e+09
        %v633 = vld [vmem:[%s2] sm:$0x1]
        %v634 = vld [vmem:[%s3] sm:$0x1]
        %vm635 = vcmask 261120
        %v636 = vsel %vm635, %v629, 0.0
        %637 = vadd.xlane.f32.xlu0 %v636
        %v638 = vpop.xlane.xlu0 %637
        %v639 = vrcp.pop 32.0
        %v640 = vmul.f32 %v638, %v639
        %v641 = vsub.f32 %v629, %v640
        %v642 = vmul.f32 %v641, %v641
        %v643 = vsel %vm635, %v642, 0.0
        %644 = vadd.xlane.f32.xlu0 %v643
        %v645 = vpop.xlane.xlu0 %644
        %v646 = vmul.f32 %v645, %v639
        %v647 = vadd.f32 %v646, 1e-05
        %v648 = vrsqrt.pop %v647
        %v649 = vmul.f32 %v641, %v648
        %v651 = vlaneseq
        %v652 = vshrl.u32 %v651, 7
        %v653 = vsub.s32 0, %v652
        %v654 = vrot.slane %v633, %v653
        %v656 = vmul.f32 %v649, %v654
        %v658 = vlaneseq
        %v659 = vshrl.u32 %v658, 7
        %v660 = vsub.s32 0, %v659
        %v661 = vrot.slane %v634, %v660
        %v663 = vadd.f32 %v656, %v661
        %v664 = vpack.c.bf16 %v663, %v663
        %v665 = vld [vmem:[%s4] sm:$0xf]
        %v666 = vld [vmem:[%s4 + $0x4] sm:$0xf]
        %v667 = vld [vmem:[%s4 + $0x8] sm:$0xf]
        %v668 = vld [vmem:[%s4 + $0xc] sm:$0xf]
        %v669 = vld [vmem:[%s5] sm:$0x1]
        %v671 = vlaneseq
        %v672 = vshrl.u32 %v671, 7
        %v673 = vsub.s32 0, %v672
        %v674 = vrot.slane %v669, %v673
        %v680 = vunpack.c.l.b16 %v665
        %v681 = vunpack.c.l.b16 %v666
        %v682 = vunpack.c.l.b16 %v667
        %v683 = vunpack.c.l.b16 %v668
        %v684 = vpack.c.b16 %v681, %v680
        %v685 = vpack.c.b16 %v683, %v682
        %v689 = vsel %vm635, %v664, 0
        %691 = vmatprep.subr.bf16.mxu0 0
        %692 = vmatpush1.bf16.msra.mxu0 0
        %693 = vmatprep.subr.bf16.mxu0 0
        %694 = vmatpush1.bf16.msra.mxu0 0
        %695 = vmatprep.subr.bf16.mxu0 0
        %696 = vmatpush1.bf16.msra.mxu0 0
        %697 = vmatprep.subr.bf16.mxu0 0
        %698 = vmatpush1.bf16.msra.mxu0 0
        %699 = vmatprep.subr.bf16.mxu0 0
        %700 = vmatpush1.bf16.msra.mxu0 0
        %701 = vmatprep.subr.bf16.mxu0 0
        %702 = vmatpush1.bf16.msra.mxu0 0
        %703 = vmatprep.subr.bf16.mxu0 0
        %704 = vmatpush1.bf16.msra.mxu0 %v685
        %705 = vmatprep.subr.bf16.mxu0 0
        %706 = vmatpush1.bf16.msra.mxu0 %v684
        %707 = vmatprep.subr.bf16.mxu0 0
        %708 = vmatpush2.bf16.msra.mxu0 0
        %709 = vmatprep.subr.bf16.mxu0 0
        %710 = vmatpush2.bf16.msra.mxu0 0
        %711 = vmatprep.subr.bf16.mxu0 0
        %712 = vmatpush2.bf16.msra.mxu0 0
        %713 = vmatprep.subr.bf16.mxu0 0
        %714 = vmatpush2.bf16.msra.mxu0 0
        %715 = vmatprep.subr.bf16.mxu0 0
        %716 = vmatpush2.bf16.msra.mxu0 0
        %717 = vmatprep.subr.bf16.mxu0 0
        %718 = vmatpush2.bf16.msra.mxu0 0
        %719 = vmatprep.subr.bf16.mxu0 0
        %720 = vmatpush2.bf16.msra.mxu0 0
        %721 = vmatprep.subr.bf16.mxu0 0
        %722 = vmatpush2.bf16.msra.mxu0 0
        %723 = vmatprep.mubr.bf16.mxu0 0
        %724 = vmatmul.mubr.bf16.gmra.mxu0 %v689
        %v725 = vpop.f32.mrf.mxu0
        %v726 = vadd.f32 %v674, %v725
        %v727 = vpop.f32.mrf.mxu0
        %v728 = vpop.f32.mrf.mxu0
        %v729 = vpop.f32.mrf.mxu0
        %730 = vdwg.mxu0
        %v731 = vld [vmem:[%s6] sm:$0xf]
        %v732 = vld [vmem:[%s6 + $0x4] sm:$0xf]
        %v733 = vld [vmem:[%s6 + $0x8] sm:$0xf]
        %v734 = vld [vmem:[%s6 + $0xc] sm:$0xf]
        %v735 = vld [vmem:[%s7] sm:$0x1]
        %v737 = vlaneseq
        %v738 = vshrl.u32 %v737, 7
        %v739 = vsub.s32 0, %v738
        %v740 = vrot.slane %v735, %v739
        %v746 = vunpack.c.l.b16 %v731
        %v747 = vunpack.c.l.b16 %v732
        %v748 = vunpack.c.l.b16 %v733
        %v749 = vunpack.c.l.b16 %v734
        %v750 = vpack.c.b16 %v747, %v746
        %v751 = vpack.c.b16 %v749, %v748
        %754 = vmatprep.subr.bf16.mxu0 0
        %755 = vmatpush1.bf16.msra.mxu0 0
        %756 = vmatprep.subr.bf16.mxu0 0
        %757 = vmatpush1.bf16.msra.mxu0 0
        %758 = vmatprep.subr.bf16.mxu0 0
        %759 = vmatpush1.bf16.msra.mxu0 0
        %760 = vmatprep.subr.bf16.mxu0 0
        %761 = vmatpush1.bf16.msra.mxu0 0
        %762 = vmatprep.subr.bf16.mxu0 0
        %763 = vmatpush1.bf16.msra.mxu0 0
        %764 = vmatprep.subr.bf16.mxu0 0
        %765 = vmatpush1.bf16.msra.mxu0 0
        %766 = vmatprep.subr.bf16.mxu0 0
        %767 = vmatpush1.bf16.msra.mxu0 %v751
        %768 = vmatprep.subr.bf16.mxu0 0
        %769 = vmatpush1.bf16.msra.mxu0 %v750
        %770 = vmatprep.subr.bf16.mxu0 0
        %771 = vmatpush2.bf16.msra.mxu0 0
        %772 = vmatprep.subr.bf16.mxu0 0
        %773 = vmatpush2.bf16.msra.mxu0 0
        %774 = vmatprep.subr.bf16.mxu0 0
        %775 = vmatpush2.bf16.msra.mxu0 0
        %776 = vmatprep.subr.bf16.mxu0 0
        %777 = vmatpush2.bf16.msra.mxu0 0
        %778 = vmatprep.subr.bf16.mxu0 0
        %779 = vmatpush2.bf16.msra.mxu0 0
        %780 = vmatprep.subr.bf16.mxu0 0
        %781 = vmatpush2.bf16.msra.mxu0 0
        %782 = vmatprep.subr.bf16.mxu0 0
        %783 = vmatpush2.bf16.msra.mxu0 0
        %784 = vmatprep.subr.bf16.mxu0 0
        %785 = vmatpush2.bf16.msra.mxu0 0
        %786 = vmatprep.mubr.bf16.mxu0 0
        %787 = vmatmul.mubr.bf16.gmra.mxu0 %v689
        %v788 = vpop.f32.mrf.mxu0
        %v789 = vadd.f32 %v740, %v788
        %v790 = vpop.f32.mrf.mxu0
        %v791 = vpop.f32.mrf.mxu0
        %v792 = vpop.f32.mrf.mxu0
        %793 = vdwg.mxu0
        %v794 = vld [vmem:[#allocation5] sm:$0xf]
        %v795 = vld [vmem:[#allocation5 + $0x4] sm:$0xf]
        %v796 = vld [vmem:[#allocation5 + $0x8] sm:$0xf]
        %v797 = vld [vmem:[#allocation5 + $0xc] sm:$0xf]
        %v798 = vld [vmem:[%s9] sm:$0x1]
        %v800 = vlaneseq
        %v801 = vshrl.u32 %v800, 7
        %v802 = vsub.s32 0, %v801
        %v803 = vrot.slane %v798, %v802
        %v809 = vunpack.c.l.b16 %v794
        %v810 = vunpack.c.l.b16 %v795
        %v811 = vunpack.c.l.b16 %v796
        %v812 = vunpack.c.l.b16 %v797
        %v813 = vpack.c.b16 %v810, %v809
        %v814 = vpack.c.b16 %v812, %v811
        %817 = vmatprep.subr.bf16.mxu0 0
        %818 = vmatpush1.bf16.msra.mxu0 0
        %819 = vmatprep.subr.bf16.mxu0 0
        %820 = vmatpush1.bf16.msra.mxu0 0
        %821 = vmatprep.subr.bf16.mxu0 0
        %822 = vmatpush1.bf16.msra.mxu0 0
        %823 = vmatprep.subr.bf16.mxu0 0
        %824 = vmatpush1.bf16.msra.mxu0 0
        %825 = vmatprep.subr.bf16.mxu0 0
        %826 = vmatpush1.bf16.msra.mxu0 0
        %827 = vmatprep.subr.bf16.mxu0 0
        %828 = vmatpush1.bf16.msra.mxu0 0
        %829 = vmatprep.subr.bf16.mxu0 0
        %830 = vmatpush1.bf16.msra.mxu0 %v814
        %831 = vmatprep.subr.bf16.mxu0 0
        %832 = vmatpush1.bf16.msra.mxu0 %v813
        %833 = vmatprep.subr.bf16.mxu0 0
        %834 = vmatpush2.bf16.msra.mxu0 0
        %835 = vmatprep.subr.bf16.mxu0 0
        %836 = vmatpush2.bf16.msra.mxu0 0
        %837 = vmatprep.subr.bf16.mxu0 0
        %838 = vmatpush2.bf16.msra.mxu0 0
        %839 = vmatprep.subr.bf16.mxu0 0
        %840 = vmatpush2.bf16.msra.mxu0 0
        %841 = vmatprep.subr.bf16.mxu0 0
        %842 = vmatpush2.bf16.msra.mxu0 0
        %843 = vmatprep.subr.bf16.mxu0 0
        %844 = vmatpush2.bf16.msra.mxu0 0
        %845 = vmatprep.subr.bf16.mxu0 0
        %846 = vmatpush2.bf16.msra.mxu0 0
        %847 = vmatprep.subr.bf16.mxu0 0
        %848 = vmatpush2.bf16.msra.mxu0 0
        %849 = vmatprep.mubr.bf16.mxu0 0
        %850 = vmatmul.mubr.bf16.gmra.mxu0 %v689
        %v851 = vpop.f32.mrf.mxu0
        %v852 = vadd.f32 %v803, %v851
        %v853 = vpop.f32.mrf.mxu0
        %v854 = vpop.f32.mrf.mxu0
        %v855 = vpop.f32.mrf.mxu0
        %856 = vdwg.mxu0
        %v857 = vmul.f32 %v726, 0.35355338
        %v858 = vpack.c.bf16 %v857, %v857
        %v859 = vpack.c.bf16 %v789, %v789
        %v860 = vpack.c.bf16 %v852, %v852
        %v861 = vld [vmem:[#allocation7] sm:$0xf]
        %v862 = vld [vmem:[#allocation7 + $0x4] sm:$0xf]
        %v863 = vld [vmem:[#allocation7 + $0x8] sm:$0xf]
        %v864 = vld [vmem:[#allocation7 + $0xc] sm:$0xf]
        %vm865 = vcmask 64512
        %v867 = vsel %vm865, %v858, 0
        %v870 = vsel %vm865, %v859, 0
        %872 = vmatprep.subr.bf16.mxu0 0
        %873 = vmatpush1.bf16.xpose.msra.mxu0 0
        %874 = vmatprep.subr.bf16.mxu0 0
        %875 = vmatpush1.bf16.xpose.msra.mxu0 0
        %876 = vmatprep.subr.bf16.mxu0 0
        %877 = vmatpush1.bf16.xpose.msra.mxu0 0
        %878 = vmatprep.subr.bf16.mxu0 0
        %879 = vmatpush1.bf16.xpose.msra.mxu0 0
        %880 = vmatprep.subr.bf16.mxu0 0
        %881 = vmatpush1.bf16.xpose.msra.mxu0 0
        %882 = vmatprep.subr.bf16.mxu0 0
        %883 = vmatpush1.bf16.xpose.msra.mxu0 0
        %884 = vmatprep.subr.bf16.mxu0 0
        %885 = vmatpush1.bf16.xpose.msra.mxu0 0
        %886 = vmatprep.subr.bf16.mxu0 0
        %887 = vmatpush1.bf16.xpose.msra.mxu0 %v870
        %888 = vmatprep.subr.bf16.mxu0 0
        %889 = vmatpush2.bf16.xpose.msra.mxu0 0
        %890 = vmatprep.subr.bf16.mxu0 0
        %891 = vmatpush2.bf16.xpose.msra.mxu0 0
        %892 = vmatprep.subr.bf16.mxu0 0
        %893 = vmatpush2.bf16.xpose.msra.mxu0 0
        %894 = vmatprep.subr.bf16.mxu0 0
        %895 = vmatpush2.bf16.xpose.msra.mxu0 0
        %896 = vmatprep.subr.bf16.mxu0 0
        %897 = vmatpush2.bf16.xpose.msra.mxu0 0
        %898 = vmatprep.subr.bf16.mxu0 0
        %899 = vmatpush2.bf16.xpose.msra.mxu0 0
        %900 = vmatprep.subr.bf16.mxu0 0
        %901 = vmatpush2.bf16.xpose.msra.mxu0 0
        %902 = vmatprep.subr.bf16.mxu0 0
        %903 = vmatpush2.bf16.xpose.msra.mxu0 0
        %904 = vmatprep.mubr.bf16.mxu0 0
        %905 = vmatmul.mubr.bf16.gmra.mxu0 %v867
        %v906 = vpop.f32.mrf.mxu0
        %v907 = vadd.f32 %v632, %v906
        %v908 = vpop.f32.mrf.mxu0
        %v909 = vpop.f32.mrf.mxu0
        %v910 = vpop.f32.mrf.mxu0
        %911 = vdwg.mxu0
        %v912 = vsel %vm865, %v907, -inf
        %913 = vmax.xlane.f32.xlu0 %v912
        %v914 = vpop.xlane.xlu0 %913
        %v915 = vsub.f32 %v907, %v914
        %v916 = vmul.f32 %v915, 1.442695
        %v917 = vpow.pop %v916
        %v918 = vsel %vm865, %v917, 0.0
        %919 = vadd.xlane.f32.xlu0 %v918
        %v920 = vpop.xlane.xlu0 %919
        %v921 = vrcp.pop %v920
        %v922 = vmul.f32 %v917, %v921
        %v923 = vpack.c.bf16 %v922, %v922
        %v925 = vsel %vm865, %v923, 0
        %vm927 = vcmask 1043456
        %v929 = vsel %vm927, %v860, 0
        %931 = vmatprep.subr.bf16.mxu0 0
        %932 = vmatpush1.bf16.msra.mxu0 0
        %933 = vmatprep.subr.bf16.mxu0 0
        %934 = vmatpush1.bf16.msra.mxu0 0
        %935 = vmatprep.subr.bf16.mxu0 0
        %936 = vmatpush1.bf16.msra.mxu0 0
        %937 = vmatprep.subr.bf16.mxu0 0
        %938 = vmatpush1.bf16.msra.mxu0 0
        %939 = vmatprep.subr.bf16.mxu0 0
        %940 = vmatpush1.bf16.msra.mxu0 0
        %941 = vmatprep.subr.bf16.mxu0 0
        %942 = vmatpush1.bf16.msra.mxu0 0
        %943 = vmatprep.subr.bf16.mxu0 0
        %944 = vmatpush1.bf16.msra.mxu0 0
        %945 = vmatprep.subr.bf16.mxu0 0
        %946 = vmatpush1.bf16.msra.mxu0 %v929
        %947 = vmatprep.subr.bf16.mxu0 0
        %948 = vmatpush2.bf16.msra.mxu0 0
        %949 = vmatprep.subr.bf16.mxu0 0
        %950 = vmatpush2.bf16.msra.mxu0 0
        %951 = vmatprep.subr.bf16.mxu0 0
        %952 = vmatpush2.bf16.msra.mxu0 0
        %953 = vmatprep.subr.bf16.mxu0 0
        %954 = vmatpush2.bf16.msra.mxu0 0
        %955 = vmatprep.subr.bf16.mxu0 0
        %956 = vmatpush2.bf16.msra.mxu0 0
        %957 = vmatprep.subr.bf16.mxu0 0
        %958 = vmatpush2.bf16.msra.mxu0 0
        %959 = vmatprep.subr.bf16.mxu0 0
        %960 = vmatpush2.bf16.msra.mxu0 0
        %961 = vmatprep.subr.bf16.mxu0 0
        %962 = vmatpush2.bf16.msra.mxu0 0
        %963 = vmatprep.mubr.bf16.mxu0 0
        %964 = vmatmul.mubr.bf16.gmra.mxu0 %v925
        %v965 = vpop.f32.mrf.mxu0
        %v966 = vadd.f32 0.0, %v965
        %v967 = vpop.f32.mrf.mxu0
        %v968 = vpop.f32.mrf.mxu0
        %v969 = vpop.f32.mrf.mxu0
        %970 = vdwg.mxu0
        %v971 = vpack.c.bf16 %v966, %v966
        %973 = vrot.lane.b32.xlu0 %v858, 120
        %v974 = vpop.permute.xlu0 %973
        %976 = vrot.lane.b32.xlu0 %v859, 120
        %v977 = vpop.permute.xlu0 %976
        %v979 = vsel %vm865, %v974, 0
        %v982 = vsel %vm865, %v977, 0
        %984 = vmatprep.subr.bf16.mxu0 0
        %985 = vmatpush1.bf16.xpose.msra.mxu0 0
        %986 = vmatprep.subr.bf16.mxu0 0
        %987 = vmatpush1.bf16.xpose.msra.mxu0 0
        %988 = vmatprep.subr.bf16.mxu0 0
        %989 = vmatpush1.bf16.xpose.msra.mxu0 0
        %990 = vmatprep.subr.bf16.mxu0 0
        %991 = vmatpush1.bf16.xpose.msra.mxu0 0
        %992 = vmatprep.subr.bf16.mxu0 0
        %993 = vmatpush1.bf16.xpose.msra.mxu0 0
        %994 = vmatprep.subr.bf16.mxu0 0
        %995 = vmatpush1.bf16.xpose.msra.mxu0 0
        %996 = vmatprep.subr.bf16.mxu0 0
        %997 = vmatpush1.bf16.xpose.msra.mxu0 0
        %998 = vmatprep.subr.bf16.mxu0 0
        %999 = vmatpush1.bf16.xpose.msra.mxu0 %v982
        %1000 = vmatprep.subr.bf16.mxu0 0
        %1001 = vmatpush2.bf16.xpose.msra.mxu0 0
        %1002 = vmatprep.subr.bf16.mxu0 0
        %1003 = vmatpush2.bf16.xpose.msra.mxu0 0
        %1004 = vmatprep.subr.bf16.mxu0 0
        %1005 = vmatpush2.bf16.xpose.msra.mxu0 0
        %1006 = vmatprep.subr.bf16.mxu0 0
        %1007 = vmatpush2.bf16.xpose.msra.mxu0 0
        %1008 = vmatprep.subr.bf16.mxu0 0
        %1009 = vmatpush2.bf16.xpose.msra.mxu0 0
        %1010 = vmatprep.subr.bf16.mxu0 0
        %1011 = vmatpush2.bf16.xpose.msra.mxu0 0
        %1012 = vmatprep.subr.bf16.mxu0 0
        %1013 = vmatpush2.bf16.xpose.msra.mxu0 0
        %1014 = vmatprep.subr.bf16.mxu0 0
        %1015 = vmatpush2.bf16.xpose.msra.mxu0 0
        %1016 = vmatprep.mubr.bf16.mxu0 0
        %1017 = vmatmul.mubr.bf16.gmra.mxu0 %v979
        %v1018 = vpop.f32.mrf.mxu0
        %v1019 = vadd.f32 %v632, %v1018
        %v1020 = vpop.f32.mrf.mxu0
        %v1021 = vpop.f32.mrf.mxu0
        %v1022 = vpop.f32.mrf.mxu0
        %1023 = vdwg.mxu0
        %v1024 = vsel %vm865, %v1019, -inf
        %1025 = vmax.xlane.f32.xlu0 %v1024
        %v1026 = vpop.xlane.xlu0 %1025
        %v1027 = vsub.f32 %v1019, %v1026
        %v1028 = vmul.f32 %v1027, 1.442695
        %v1029 = vpow.pop %v1028
        %v1030 = vsel %vm865, %v1029, 0.0
        %1031 = vadd.xlane.f32.xlu0 %v1030
        %v1032 = vpop.xlane.xlu0 %1031
        %v1033 = vrcp.pop %v1032
        %v1034 = vmul.f32 %v1029, %v1033
        %v1035 = vpack.c.bf16 %v1034, %v1034
        %1037 = vrot.lane.b32.xlu0 %v860, 120
        %v1038 = vpop.permute.xlu0 %1037
        %v1040 = vsel %vm865, %v1035, 0
        %v1043 = vsel %vm927, %v1038, 0
        %1045 = vmatprep.subr.bf16.mxu0 0
        %1046 = vmatpush1.bf16.msra.mxu0 0
        %1047 = vmatprep.subr.bf16.mxu0 0
        %1048 = vmatpush1.bf16.msra.mxu0 0
        %1049 = vmatprep.subr.bf16.mxu0 0
        %1050 = vmatpush1.bf16.msra.mxu0 0
        %1051 = vmatprep.subr.bf16.mxu0 0
        %1052 = vmatpush1.bf16.msra.mxu0 0
        %1053 = vmatprep.subr.bf16.mxu0 0
        %1054 = vmatpush1.bf16.msra.mxu0 0
        %1055 = vmatprep.subr.bf16.mxu0 0
        %1056 = vmatpush1.bf16.msra.mxu0 0
        %1057 = vmatprep.subr.bf16.mxu0 0
        %1058 = vmatpush1.bf16.msra.mxu0 0
        %1059 = vmatprep.subr.bf16.mxu0 0
        %1060 = vmatpush1.bf16.msra.mxu0 %v1043
        %1061 = vmatprep.subr.bf16.mxu0 0
        %1062 = vmatpush2.bf16.msra.mxu0 0
        %1063 = vmatprep.subr.bf16.mxu0 0
        %1064 = vmatpush2.bf16.msra.mxu0 0
        %1065 = vmatprep.subr.bf16.mxu0 0
        %1066 = vmatpush2.bf16.msra.mxu0 0
        %1067 = vmatprep.subr.bf16.mxu0 0
        %1068 = vmatpush2.bf16.msra.mxu0 0
        %1069 = vmatprep.subr.bf16.mxu0 0
        %1070 = vmatpush2.bf16.msra.mxu0 0
        %1071 = vmatprep.subr.bf16.mxu0 0
        %1072 = vmatpush2.bf16.msra.mxu0 0
        %1073 = vmatprep.subr.bf16.mxu0 0
        %1074 = vmatpush2.bf16.msra.mxu0 0
        %1075 = vmatprep.subr.bf16.mxu0 0
        %1076 = vmatpush2.bf16.msra.mxu0 0
        %1077 = vmatprep.mubr.bf16.mxu0 0
        %1078 = vmatmul.mubr.bf16.gmra.mxu0 %v1040
        %v1079 = vpop.f32.mrf.mxu0
        %v1080 = vadd.f32 0.0, %v1079
        %v1081 = vpop.f32.mrf.mxu0
        %v1082 = vpop.f32.mrf.mxu0
        %v1083 = vpop.f32.mrf.mxu0
        %1084 = vdwg.mxu0
        %v1085 = vpack.c.bf16 %v1080, %v1080
        %v1087 = vsel %vm865, %v1085, 0
        %v1090 = vsel %vm927, %v862, 0
        %1092 = vmatprep.subr.bf16.mxu0 0
        %1093 = vmatpush1.bf16.msra.mxu0 0
        %1094 = vmatprep.subr.bf16.mxu0 0
        %1095 = vmatpush1.bf16.msra.mxu0 0
        %1096 = vmatprep.subr.bf16.mxu0 0
        %1097 = vmatpush1.bf16.msra.mxu0 0
        %1098 = vmatprep.subr.bf16.mxu0 0
        %1099 = vmatpush1.bf16.msra.mxu0 0
        %1100 = vmatprep.subr.bf16.mxu0 0
        %1101 = vmatpush1.bf16.msra.mxu0 0
        %1102 = vmatprep.subr.bf16.mxu0 0
        %1103 = vmatpush1.bf16.msra.mxu0 0
        %1104 = vmatprep.subr.bf16.mxu0 0
        %1105 = vmatpush1.bf16.msra.mxu0 0
        %1106 = vmatprep.subr.bf16.mxu0 0
        %1107 = vmatpush1.bf16.msra.mxu0 %v1090
        %1108 = vmatprep.subr.bf16.mxu0 0
        %1109 = vmatpush2.bf16.msra.mxu0 0
        %1110 = vmatprep.subr.bf16.mxu0 0
        %1111 = vmatpush2.bf16.msra.mxu0 0
        %1112 = vmatprep.subr.bf16.mxu0 0
        %1113 = vmatpush2.bf16.msra.mxu0 0
        %1114 = vmatprep.subr.bf16.mxu0 0
        %1115 = vmatpush2.bf16.msra.mxu0 0
        %1116 = vmatprep.subr.bf16.mxu0 0
        %1117 = vmatpush2.bf16.msra.mxu0 0
        %1118 = vmatprep.subr.bf16.mxu0 0
        %1119 = vmatpush2.bf16.msra.mxu0 0
        %1120 = vmatprep.subr.bf16.mxu0 0
        %1121 = vmatpush2.bf16.msra.mxu0 0
        %1122 = vmatprep.subr.bf16.mxu0 0
        %1123 = vmatpush2.bf16.msra.mxu0 0
        %1124 = vmatprep.mubr.bf16.mxu0 0
        %1125 = vmatmul.mubr.bf16.gmra.mxu0 %v1087
        %v1126 = vpop.f32.mrf.mxu0
        %v1127 = vadd.f32 0.0, %v1126
        %v1128 = vpop.f32.mrf.mxu0
        %v1129 = vpop.f32.mrf.mxu0
        %v1130 = vpop.f32.mrf.mxu0
        %1131 = vdwg.mxu0
        %v1133 = vsel %vm865, %v971, 0
        %v1136 = vsel %vm927, %v861, 0
        %1138 = vmatprep.subr.bf16.mxu0 0
        %1139 = vmatpush1.bf16.msra.mxu0 0
        %1140 = vmatprep.subr.bf16.mxu0 0
        %1141 = vmatpush1.bf16.msra.mxu0 0
        %1142 = vmatprep.subr.bf16.mxu0 0
        %1143 = vmatpush1.bf16.msra.mxu0 0
        %1144 = vmatprep.subr.bf16.mxu0 0
        %1145 = vmatpush1.bf16.msra.mxu0 0
        %1146 = vmatprep.subr.bf16.mxu0 0
        %1147 = vmatpush1.bf16.msra.mxu0 0
        %1148 = vmatprep.subr.bf16.mxu0 0
        %1149 = vmatpush1.bf16.msra.mxu0 0
        %1150 = vmatprep.subr.bf16.mxu0 0
        %1151 = vmatpush1.bf16.msra.mxu0 0
        %1152 = vmatprep.subr.bf16.mxu0 0
        %1153 = vmatpush1.bf16.msra.mxu0 %v1136
        %1154 = vmatprep.subr.bf16.mxu0 0
        %1155 = vmatpush2.bf16.msra.mxu0 0
        %1156 = vmatprep.subr.bf16.mxu0 0
        %1157 = vmatpush2.bf16.msra.mxu0 0
        %1158 = vmatprep.subr.bf16.mxu0 0
        %1159 = vmatpush2.bf16.msra.mxu0 0
        %1160 = vmatprep.subr.bf16.mxu0 0
        %1161 = vmatpush2.bf16.msra.mxu0 0
        %1162 = vmatprep.subr.bf16.mxu0 0
        %1163 = vmatpush2.bf16.msra.mxu0 0
        %1164 = vmatprep.subr.bf16.mxu0 0
        %1165 = vmatpush2.bf16.msra.mxu0 0
        %1166 = vmatprep.subr.bf16.mxu0 0
        %1167 = vmatpush2.bf16.msra.mxu0 0
        %1168 = vmatprep.subr.bf16.mxu0 0
        %1169 = vmatpush2.bf16.msra.mxu0 0
        %1170 = vmatprep.mubr.bf16.mxu0 0
        %1171 = vmatmul.mubr.bf16.gmra.mxu0 %v1133
        %v1172 = vpop.f32.mrf.mxu0
        %v1173 = vadd.f32 %v1127, %v1172
        %v1174 = vpop.f32.mrf.mxu0
        %v1175 = vpop.f32.mrf.mxu0
        %v1176 = vpop.f32.mrf.mxu0
        %1177 = vdwg.mxu0
        %1178 = vrot.lane.b32.xlu0 %v858, 112
        %v1179 = vpop.permute.xlu0 %1178
        %1180 = vrot.lane.b32.xlu0 %v859, 112
        %v1181 = vpop.permute.xlu0 %1180
        %v1183 = vsel %vm865, %v1179, 0
        %v1186 = vsel %vm865, %v1181, 0
        %1188 = vmatprep.subr.bf16.mxu0 0
        %1189 = vmatpush1.bf16.xpose.msra.mxu0 0
        %1190 = vmatprep.subr.bf16.mxu0 0
        %1191 = vmatpush1.bf16.xpose.msra.mxu0 0
        %1192 = vmatprep.subr.bf16.mxu0 0
        %1193 = vmatpush1.bf16.xpose.msra.mxu0 0
        %1194 = vmatprep.subr.bf16.mxu0 0
        %1195 = vmatpush1.bf16.xpose.msra.mxu0 0
        %1196 = vmatprep.subr.bf16.mxu0 0
        %1197 = vmatpush1.bf16.xpose.msra.mxu0 0
        %1198 = vmatprep.subr.bf16.mxu0 0
        %1199 = vmatpush1.bf16.xpose.msra.mxu0 0
        %1200 = vmatprep.subr.bf16.mxu0 0
        %1201 = vmatpush1.bf16.xpose.msra.mxu0 0
        %1202 = vmatprep.subr.bf16.mxu0 0
        %1203 = vmatpush1.bf16.xpose.msra.mxu0 %v1186
        %1204 = vmatprep.subr.bf16.mxu0 0
        %1205 = vmatpush2.bf16.xpose.msra.mxu0 0
        %1206 = vmatprep.subr.bf16.mxu0 0
        %1207 = vmatpush2.bf16.xpose.msra.mxu0 0
        %1208 = vmatprep.subr.bf16.mxu0 0
        %1209 = vmatpush2.bf16.xpose.msra.mxu0 0
        %1210 = vmatprep.subr.bf16.mxu0 0
        %1211 = vmatpush2.bf16.xpose.msra.mxu0 0
        %1212 = vmatprep.subr.bf16.mxu0 0
        %1213 = vmatpush2.bf16.xpose.msra.mxu0 0
        %1214 = vmatprep.subr.bf16.mxu0 0
        %1215 = vmatpush2.bf16.xpose.msra.mxu0 0
        %1216 = vmatprep.subr.bf16.mxu0 0
        %1217 = vmatpush2.bf16.xpose.msra.mxu0 0
        %1218 = vmatprep.subr.bf16.mxu0 0
        %1219 = vmatpush2.bf16.xpose.msra.mxu0 0
        %1220 = vmatprep.mubr.bf16.mxu0 0
        %1221 = vmatmul.mubr.bf16.gmra.mxu0 %v1183
        %v1222 = vpop.f32.mrf.mxu0
        %v1223 = vadd.f32 %v632, %v1222
        %v1224 = vpop.f32.mrf.mxu0
        %v1225 = vpop.f32.mrf.mxu0
        %v1226 = vpop.f32.mrf.mxu0
        %1227 = vdwg.mxu0
        %v1228 = vsel %vm865, %v1223, -inf
        %1229 = vmax.xlane.f32.xlu0 %v1228
        %v1230 = vpop.xlane.xlu0 %1229
        %v1231 = vsub.f32 %v1223, %v1230
        %v1232 = vmul.f32 %v1231, 1.442695
        %v1233 = vpow.pop %v1232
        %v1234 = vsel %vm865, %v1233, 0.0
        %1235 = vadd.xlane.f32.xlu0 %v1234
        %v1236 = vpop.xlane.xlu0 %1235
        %v1237 = vrcp.pop %v1236
        %v1238 = vmul.f32 %v1233, %v1237
        %v1239 = vpack.c.bf16 %v1238, %v1238
        %1240 = vrot.lane.b32.xlu0 %v860, 112
        %v1241 = vpop.permute.xlu0 %1240
        %v1243 = vsel %vm865, %v1239, 0
        %v1246 = vsel %vm927, %v1241, 0
        %1248 = vmatprep.subr.bf16.mxu0 0
        %1249 = vmatpush1.bf16.msra.mxu0 0
        %1250 = vmatprep.subr.bf16.mxu0 0
        %1251 = vmatpush1.bf16.msra.mxu0 0
        %1252 = vmatprep.subr.bf16.mxu0 0
        %1253 = vmatpush1.bf16.msra.mxu0 0
        %1254 = vmatprep.subr.bf16.mxu0 0
        %1255 = vmatpush1.bf16.msra.mxu0 0
        %1256 = vmatprep.subr.bf16.mxu0 0
        %1257 = vmatpush1.bf16.msra.mxu0 0
        %1258 = vmatprep.subr.bf16.mxu0 0
        %1259 = vmatpush1.bf16.msra.mxu0 0
        %1260 = vmatprep.subr.bf16.mxu0 0
        %1261 = vmatpush1.bf16.msra.mxu0 0
        %1262 = vmatprep.subr.bf16.mxu0 0
        %1263 = vmatpush1.bf16.msra.mxu0 %v1246
        %1264 = vmatprep.subr.bf16.mxu0 0
        %1265 = vmatpush2.bf16.msra.mxu0 0
        %1266 = vmatprep.subr.bf16.mxu0 0
        %1267 = vmatpush2.bf16.msra.mxu0 0
        %1268 = vmatprep.subr.bf16.mxu0 0
        %1269 = vmatpush2.bf16.msra.mxu0 0
        %1270 = vmatprep.subr.bf16.mxu0 0
        %1271 = vmatpush2.bf16.msra.mxu0 0
        %1272 = vmatprep.subr.bf16.mxu0 0
        %1273 = vmatpush2.bf16.msra.mxu0 0
        %1274 = vmatprep.subr.bf16.mxu0 0
        %1275 = vmatpush2.bf16.msra.mxu0 0
        %1276 = vmatprep.subr.bf16.mxu0 0
        %1277 = vmatpush2.bf16.msra.mxu0 0
        %1278 = vmatprep.subr.bf16.mxu0 0
        %1279 = vmatpush2.bf16.msra.mxu0 0
        %1280 = vmatprep.mubr.bf16.mxu0 0
        %1281 = vmatmul.mubr.bf16.gmra.mxu0 %v1243
        %v1282 = vpop.f32.mrf.mxu0
        %v1283 = vadd.f32 0.0, %v1282
        %v1284 = vpop.f32.mrf.mxu0
        %v1285 = vpop.f32.mrf.mxu0
        %v1286 = vpop.f32.mrf.mxu0
        %1287 = vdwg.mxu0
        %v1288 = vpack.c.bf16 %v1283, %v1283
        %v1290 = vsel %vm865, %v1288, 0
        %v1293 = vsel %vm927, %v863, 0
        %1295 = vmatprep.subr.bf16.mxu0 0
        %1296 = vmatpush1.bf16.msra.mxu0 0
        %1297 = vmatprep.subr.bf16.mxu0 0
        %1298 = vmatpush1.bf16.msra.mxu0 0
        %1299 = vmatprep.subr.bf16.mxu0 0
        %1300 = vmatpush1.bf16.msra.mxu0 0
        %1301 = vmatprep.subr.bf16.mxu0 0
        %1302 = vmatpush1.bf16.msra.mxu0 0
        %1303 = vmatprep.subr.bf16.mxu0 0
        %1304 = vmatpush1.bf16.msra.mxu0 0
        %1305 = vmatprep.subr.bf16.mxu0 0
        %1306 = vmatpush1.bf16.msra.mxu0 0
        %1307 = vmatprep.subr.bf16.mxu0 0
        %1308 = vmatpush1.bf16.msra.mxu0 0
        %1309 = vmatprep.subr.bf16.mxu0 0
        %1310 = vmatpush1.bf16.msra.mxu0 %v1293
        %1311 = vmatprep.subr.bf16.mxu0 0
        %1312 = vmatpush2.bf16.msra.mxu0 0
        %1313 = vmatprep.subr.bf16.mxu0 0
        %1314 = vmatpush2.bf16.msra.mxu0 0
        %1315 = vmatprep.subr.bf16.mxu0 0
        %1316 = vmatpush2.bf16.msra.mxu0 0
        %1317 = vmatprep.subr.bf16.mxu0 0
        %1318 = vmatpush2.bf16.msra.mxu0 0
        %1319 = vmatprep.subr.bf16.mxu0 0
        %1320 = vmatpush2.bf16.msra.mxu0 0
        %1321 = vmatprep.subr.bf16.mxu0 0
        %1322 = vmatpush2.bf16.msra.mxu0 0
        %1323 = vmatprep.subr.bf16.mxu0 0
        %1324 = vmatpush2.bf16.msra.mxu0 0
        %1325 = vmatprep.subr.bf16.mxu0 0
        %1326 = vmatpush2.bf16.msra.mxu0 0
        %1327 = vmatprep.mubr.bf16.mxu0 0
        %1328 = vmatmul.mubr.bf16.gmra.mxu0 %v1290
        %v1329 = vpop.f32.mrf.mxu0
        %v1330 = vadd.f32 0.0, %v1329
        %v1331 = vpop.f32.mrf.mxu0
        %v1332 = vpop.f32.mrf.mxu0
        %v1333 = vpop.f32.mrf.mxu0
        %1334 = vdwg.mxu0
        %v1335 = vadd.f32 %v1173, %v1330
        %1336 = vrot.lane.b32.xlu0 %v858, 104
        %v1337 = vpop.permute.xlu0 %1336
        %1338 = vrot.lane.b32.xlu0 %v859, 104
        %v1339 = vpop.permute.xlu0 %1338
        %v1341 = vsel %vm865, %v1337, 0
        %v1344 = vsel %vm865, %v1339, 0
        %1346 = vmatprep.subr.bf16.mxu0 0
        %1347 = vmatpush1.bf16.xpose.msra.mxu0 0
        %1348 = vmatprep.subr.bf16.mxu0 0
        %1349 = vmatpush1.bf16.xpose.msra.mxu0 0
        %1350 = vmatprep.subr.bf16.mxu0 0
        %1351 = vmatpush1.bf16.xpose.msra.mxu0 0
        %1352 = vmatprep.subr.bf16.mxu0 0
        %1353 = vmatpush1.bf16.xpose.msra.mxu0 0
        %1354 = vmatprep.subr.bf16.mxu0 0
        %1355 = vmatpush1.bf16.xpose.msra.mxu0 0
        %1356 = vmatprep.subr.bf16.mxu0 0
        %1357 = vmatpush1.bf16.xpose.msra.mxu0 0
        %1358 = vmatprep.subr.bf16.mxu0 0
        %1359 = vmatpush1.bf16.xpose.msra.mxu0 0
        %1360 = vmatprep.subr.bf16.mxu0 0
        %1361 = vmatpush1.bf16.xpose.msra.mxu0 %v1344
        %1362 = vmatprep.subr.bf16.mxu0 0
        %1363 = vmatpush2.bf16.xpose.msra.mxu0 0
        %1364 = vmatprep.subr.bf16.mxu0 0
        %1365 = vmatpush2.bf16.xpose.msra.mxu0 0
        %1366 = vmatprep.subr.bf16.mxu0 0
        %1367 = vmatpush2.bf16.xpose.msra.mxu0 0
        %1368 = vmatprep.subr.bf16.mxu0 0
        %1369 = vmatpush2.bf16.xpose.msra.mxu0 0
        %1370 = vmatprep.subr.bf16.mxu0 0
        %1371 = vmatpush2.bf16.xpose.msra.mxu0 0
        %1372 = vmatprep.subr.bf16.mxu0 0
        %1373 = vmatpush2.bf16.xpose.msra.mxu0 0
        %1374 = vmatprep.subr.bf16.mxu0 0
        %1375 = vmatpush2.bf16.xpose.msra.mxu0 0
        %1376 = vmatprep.subr.bf16.mxu0 0
        %1377 = vmatpush2.bf16.xpose.msra.mxu0 0
        %1378 = vmatprep.mubr.bf16.mxu0 0
        %1379 = vmatmul.mubr.bf16.gmra.mxu0 %v1341
        %v1380 = vpop.f32.mrf.mxu0
        %v1381 = vadd.f32 %v632, %v1380
        %v1382 = vpop.f32.mrf.mxu0
        %v1383 = vpop.f32.mrf.mxu0
        %v1384 = vpop.f32.mrf.mxu0
        %1385 = vdwg.mxu0
        %v1386 = vsel %vm865, %v1381, -inf
        %1387 = vmax.xlane.f32.xlu0 %v1386
        %v1388 = vpop.xlane.xlu0 %1387
        %v1389 = vsub.f32 %v1381, %v1388
        %v1390 = vmul.f32 %v1389, 1.442695
        %v1391 = vpow.pop %v1390
        %v1392 = vsel %vm865, %v1391, 0.0
        %1393 = vadd.xlane.f32.xlu0 %v1392
        %v1394 = vpop.xlane.xlu0 %1393
        %v1395 = vrcp.pop %v1394
        %v1396 = vmul.f32 %v1391, %v1395
        %v1397 = vpack.c.bf16 %v1396, %v1396
        %1398 = vrot.lane.b32.xlu0 %v860, 104
        %v1399 = vpop.permute.xlu0 %1398
        %v1401 = vsel %vm865, %v1397, 0
        %v1404 = vsel %vm927, %v1399, 0
        %1406 = vmatprep.subr.bf16.mxu0 0
        %1407 = vmatpush1.bf16.msra.mxu0 0
        %1408 = vmatprep.subr.bf16.mxu0 0
        %1409 = vmatpush1.bf16.msra.mxu0 0
        %1410 = vmatprep.subr.bf16.mxu0 0
        %1411 = vmatpush1.bf16.msra.mxu0 0
        %1412 = vmatprep.subr.bf16.mxu0 0
        %1413 = vmatpush1.bf16.msra.mxu0 0
        %1414 = vmatprep.subr.bf16.mxu0 0
        %1415 = vmatpush1.bf16.msra.mxu0 0
        %1416 = vmatprep.subr.bf16.mxu0 0
        %1417 = vmatpush1.bf16.msra.mxu0 0
        %1418 = vmatprep.subr.bf16.mxu0 0
        %1419 = vmatpush1.bf16.msra.mxu0 0
        %1420 = vmatprep.subr.bf16.mxu0 0
        %1421 = vmatpush1.bf16.msra.mxu0 %v1404
        %1422 = vmatprep.subr.bf16.mxu0 0
        %1423 = vmatpush2.bf16.msra.mxu0 0
        %1424 = vmatprep.subr.bf16.mxu0 0
        %1425 = vmatpush2.bf16.msra.mxu0 0
        %1426 = vmatprep.subr.bf16.mxu0 0
        %1427 = vmatpush2.bf16.msra.mxu0 0
        %1428 = vmatprep.subr.bf16.mxu0 0
        %1429 = vmatpush2.bf16.msra.mxu0 0
        %1430 = vmatprep.subr.bf16.mxu0 0
        %1431 = vmatpush2.bf16.msra.mxu0 0
        %1432 = vmatprep.subr.bf16.mxu0 0
        %1433 = vmatpush2.bf16.msra.mxu0 0
        %1434 = vmatprep.subr.bf16.mxu0 0
        %1435 = vmatpush2.bf16.msra.mxu0 0
        %1436 = vmatprep.subr.bf16.mxu0 0
        %1437 = vmatpush2.bf16.msra.mxu0 0
        %1438 = vmatprep.mubr.bf16.mxu0 0
        %1439 = vmatmul.mubr.bf16.gmra.mxu0 %v1401
        %v1440 = vpop.f32.mrf.mxu0
        %v1441 = vadd.f32 0.0, %v1440
        %v1442 = vpop.f32.mrf.mxu0
        %v1443 = vpop.f32.mrf.mxu0
        %v1444 = vpop.f32.mrf.mxu0
        %1445 = vdwg.mxu0
        %v1446 = vpack.c.bf16 %v1441, %v1441
        %v1448 = vsel %vm865, %v1446, 0
        %v1451 = vsel %vm927, %v864, 0
        %1453 = vmatprep.subr.bf16.mxu0 0
        %1454 = vmatpush1.bf16.msra.mxu0 0
        %1455 = vmatprep.subr.bf16.mxu0 0
        %1456 = vmatpush1.bf16.msra.mxu0 0
        %1457 = vmatprep.subr.bf16.mxu0 0
        %1458 = vmatpush1.bf16.msra.mxu0 0
        %1459 = vmatprep.subr.bf16.mxu0 0
        %1460 = vmatpush1.bf16.msra.mxu0 0
        %1461 = vmatprep.subr.bf16.mxu0 0
        %1462 = vmatpush1.bf16.msra.mxu0 0
        %1463 = vmatprep.subr.bf16.mxu0 0
        %1464 = vmatpush1.bf16.msra.mxu0 0
        %1465 = vmatprep.subr.bf16.mxu0 0
        %1466 = vmatpush1.bf16.msra.mxu0 0
        %1467 = vmatprep.subr.bf16.mxu0 0
        %1468 = vmatpush1.bf16.msra.mxu0 %v1451
        %1469 = vmatprep.subr.bf16.mxu0 0
        %1470 = vmatpush2.bf16.msra.mxu0 0
        %1471 = vmatprep.subr.bf16.mxu0 0
        %1472 = vmatpush2.bf16.msra.mxu0 0
        %1473 = vmatprep.subr.bf16.mxu0 0
        %1474 = vmatpush2.bf16.msra.mxu0 0
        %1475 = vmatprep.subr.bf16.mxu0 0
        %1476 = vmatpush2.bf16.msra.mxu0 0
        %1477 = vmatprep.subr.bf16.mxu0 0
        %1478 = vmatpush2.bf16.msra.mxu0 0
        %1479 = vmatprep.subr.bf16.mxu0 0
        %1480 = vmatpush2.bf16.msra.mxu0 0
        %1481 = vmatprep.subr.bf16.mxu0 0
        %1482 = vmatpush2.bf16.msra.mxu0 0
        %1483 = vmatprep.subr.bf16.mxu0 0
        %1484 = vmatpush2.bf16.msra.mxu0 0
        %1485 = vmatprep.mubr.bf16.mxu0 0
        %1486 = vmatmul.mubr.bf16.gmra.mxu0 %v1448
        %v1487 = vpop.f32.mrf.mxu0
        %v1488 = vadd.f32 0.0, %v1487
        %v1489 = vpop.f32.mrf.mxu0
        %v1490 = vpop.f32.mrf.mxu0
        %v1491 = vpop.f32.mrf.mxu0
        %1492 = vdwg.mxu0
        %v1493 = vadd.f32 %v1335, %v1488
        %v1494 = vld [vmem:[%s11] sm:$0x1]
        %v1496 = vlaneseq
        %v1497 = vshrl.u32 %v1496, 7
        %v1498 = vsub.s32 0, %v1497
        %v1499 = vrot.slane %v1494, %v1498
        %v1501 = vadd.f32 %v1493, %v1499
        %v1502 = vadd.f32 %v629, %v1501
        %v1503 = vld [vmem:[%s12] sm:$0x1]
        %v1504 = vld [vmem:[%s13] sm:$0x1]
        %v1505 = vsel %vm635, %v1502, 0.0
        %1506 = vadd.xlane.f32.xlu0 %v1505
        %v1507 = vpop.xlane.xlu0 %1506
        %v1508 = vmul.f32 %v1507, %v639
        %v1509 = vsub.f32 %v1502, %v1508
        %v1510 = vmul.f32 %v1509, %v1509
        %v1511 = vsel %vm635, %v1510, 0.0
        %1512 = vadd.xlane.f32.xlu0 %v1511
        %v1513 = vpop.xlane.xlu0 %1512
        %v1514 = vmul.f32 %v1513, %v639
        %v1515 = vadd.f32 %v1514, 1e-05
        %v1516 = vrsqrt.pop %v1515
        %v1517 = vmul.f32 %v1509, %v1516
        %v1519 = vlaneseq
        %v1520 = vshrl.u32 %v1519, 7
        %v1521 = vsub.s32 0, %v1520
        %v1522 = vrot.slane %v1503, %v1521
        %v1524 = vmul.f32 %v1517, %v1522
        %v1526 = vlaneseq
        %v1527 = vshrl.u32 %v1526, 7
        %v1528 = vsub.s32 0, %v1527
        %v1529 = vrot.slane %v1504, %v1528
        %v1531 = vadd.f32 %v1524, %v1529
        %v1532 = vpack.c.bf16 %v1531, %v1531
        %v1533 = vld [vmem:[#allocation8] sm:$0xf]
        %v1534 = vld [vmem:[#allocation8 + $0x4] sm:$0xf]
        %v1535 = vld [vmem:[#allocation8 + $0x8] sm:$0xf]
        %v1536 = vld [vmem:[#allocation8 + $0xc] sm:$0xf]
        %v1537 = vld [vmem:[%s15] sm:$0x1]
        %v1539 = vlaneseq
        %v1540 = vshrl.u32 %v1539, 7
        %v1541 = vsub.s32 0, %v1540
        %v1542 = vrot.slane %v1537, %v1541
        %v1548 = vunpack.c.l.b16 %v1533
        %v1549 = vunpack.c.l.b16 %v1534
        %v1550 = vunpack.c.l.b16 %v1535
        %v1551 = vunpack.c.l.b16 %v1536
        %v1552 = vpack.c.b16 %v1549, %v1548
        %v1553 = vpack.c.b16 %v1551, %v1550
        %v1557 = vsel %vm635, %v1532, 0
        %1559 = vmatprep.subr.bf16.mxu0 0
        %1560 = vmatpush1.bf16.msra.mxu0 0
        %1561 = vmatprep.subr.bf16.mxu0 0
        %1562 = vmatpush1.bf16.msra.mxu0 0
        %1563 = vmatprep.subr.bf16.mxu0 0
        %1564 = vmatpush1.bf16.msra.mxu0 0
        %1565 = vmatprep.subr.bf16.mxu0 0
        %1566 = vmatpush1.bf16.msra.mxu0 0
        %1567 = vmatprep.subr.bf16.mxu0 0
        %1568 = vmatpush1.bf16.msra.mxu0 0
        %1569 = vmatprep.subr.bf16.mxu0 0
        %1570 = vmatpush1.bf16.msra.mxu0 0
        %1571 = vmatprep.subr.bf16.mxu0 0
        %1572 = vmatpush1.bf16.msra.mxu0 %v1553
        %1573 = vmatprep.subr.bf16.mxu0 0
        %1574 = vmatpush1.bf16.msra.mxu0 %v1552
        %1575 = vmatprep.subr.bf16.mxu0 0
        %1576 = vmatpush2.bf16.msra.mxu0 0
        %1577 = vmatprep.subr.bf16.mxu0 0
        %1578 = vmatpush2.bf16.msra.mxu0 0
        %1579 = vmatprep.subr.bf16.mxu0 0
        %1580 = vmatpush2.bf16.msra.mxu0 0
        %1581 = vmatprep.subr.bf16.mxu0 0
        %1582 = vmatpush2.bf16.msra.mxu0 0
        %1583 = vmatprep.subr.bf16.mxu0 0
        %1584 = vmatpush2.bf16.msra.mxu0 0
        %1585 = vmatprep.subr.bf16.mxu0 0
        %1586 = vmatpush2.bf16.msra.mxu0 0
        %1587 = vmatprep.subr.bf16.mxu0 0
        %1588 = vmatpush2.bf16.msra.mxu0 0
        %1589 = vmatprep.subr.bf16.mxu0 0
        %1590 = vmatpush2.bf16.msra.mxu0 0
        %1591 = vmatprep.mubr.bf16.mxu0 0
        %1592 = vmatmul.mubr.bf16.gmra.mxu0 %v1557
        %v1593 = vpop.f32.mrf.mxu0
        %v1594 = vadd.f32 %v1542, %v1593
        %v1595 = vpop.f32.mrf.mxu0
        %v1596 = vpop.f32.mrf.mxu0
        %v1597 = vpop.f32.mrf.mxu0
        %1598 = vdwg.mxu0
        %v1599 = vmul.f32 %v1594, %v1594
        %v1600 = vmul.f32 %v1594, %v1599
        %v1601 = vmul.f32 %v1600, 0.044715
        %v1602 = vadd.f32 %v1594, %v1601
        %v1603 = vmul.f32 %v1602, 0.7978846
        %v1604 = vtanh.pop %v1603
        %v1605 = vadd.f32 %v1604, 1.0
        %v1606 = vmul.f32 %v1605, 0.5
        %v1607 = vmul.f32 %v1594, %v1606
        %v1608 = vpack.c.bf16 %v1607, %v1607
        %v1609 = vld [vmem:[%s16] sm:$0xf]
        %v1610 = vld [vmem:[%s16 + $0x4] sm:$0xf]
        %v1611 = vld [vmem:[%s16 + $0x8] sm:$0xf]
        %v1612 = vld [vmem:[%s16 + $0xc] sm:$0xf]
        %v1613 = vld [vmem:[%s16 + $0x10] sm:$0xf]
        %v1614 = vld [vmem:[%s16 + $0x14] sm:$0xf]
        %v1615 = vld [vmem:[%s16 + $0x18] sm:$0xf]
        %v1616 = vld [vmem:[%s16 + $0x1c] sm:$0xf]
        %v1617 = vld [vmem:[%s17] sm:$0x1]
        %v1619 = vlaneseq
        %v1620 = vshrl.u32 %v1619, 7
        %v1621 = vsub.s32 0, %v1620
        %v1622 = vrot.slane %v1617, %v1621
        %v1632 = vunpack.c.l.b16 %v1609
        %v1633 = vunpack.c.l.b16 %v1610
        %v1634 = vunpack.c.l.b16 %v1611
        %v1635 = vunpack.c.l.b16 %v1612
        %v1636 = vunpack.c.l.b16 %v1613
        %v1637 = vunpack.c.l.b16 %v1614
        %v1638 = vunpack.c.l.b16 %v1615
        %v1639 = vunpack.c.l.b16 %v1616
        %v1640 = vpack.c.b16 %v1633, %v1632
        %v1641 = vpack.c.b16 %v1635, %v1634
        %v1642 = vpack.c.b16 %v1637, %v1636
        %v1643 = vpack.c.b16 %v1639, %v1638
        %vm1648 = vcmask 523264
        %v1650 = vsel %vm1648, %v1608, 0
        %1652 = vmatprep.subr.bf16.mxu0 0
        %1653 = vmatpush1.bf16.msra.mxu0 0
        %1654 = vmatprep.subr.bf16.mxu0 0
        %1655 = vmatpush1.bf16.msra.mxu0 0
        %1656 = vmatprep.subr.bf16.mxu0 0
        %1657 = vmatpush1.bf16.msra.mxu0 0
        %1658 = vmatprep.subr.bf16.mxu0 0
        %1659 = vmatpush1.bf16.msra.mxu0 0
        %1660 = vmatprep.subr.bf16.mxu0 0
        %1661 = vmatpush1.bf16.msra.mxu0 %v1643
        %1662 = vmatprep.subr.bf16.mxu0 0
        %1663 = vmatpush1.bf16.msra.mxu0 %v1642
        %1664 = vmatprep.subr.bf16.mxu0 0
        %1665 = vmatpush1.bf16.msra.mxu0 %v1641
        %1666 = vmatprep.subr.bf16.mxu0 0
        %1667 = vmatpush1.bf16.msra.mxu0 %v1640
        %1668 = vmatprep.subr.bf16.mxu0 0
        %1669 = vmatpush2.bf16.msra.mxu0 0
        %1670 = vmatprep.subr.bf16.mxu0 0
        %1671 = vmatpush2.bf16.msra.mxu0 0
        %1672 = vmatprep.subr.bf16.mxu0 0
        %1673 = vmatpush2.bf16.msra.mxu0 0
        %1674 = vmatprep.subr.bf16.mxu0 0
        %1675 = vmatpush2.bf16.msra.mxu0 0
        %1676 = vmatprep.subr.bf16.mxu0 0
        %1677 = vmatpush2.bf16.msra.mxu0 0
        %1678 = vmatprep.subr.bf16.mxu0 0
        %1679 = vmatpush2.bf16.msra.mxu0 0
        %1680 = vmatprep.subr.bf16.mxu0 0
        %1681 = vmatpush2.bf16.msra.mxu0 0
        %1682 = vmatprep.subr.bf16.mxu0 0
        %1683 = vmatpush2.bf16.msra.mxu0 0
        %1684 = vmatprep.mubr.bf16.mxu0 0
        %1685 = vmatmul.mubr.bf16.gmra.mxu0 %v1650
        %v1686 = vpop.f32.mrf.mxu0
        %v1687 = vadd.f32 %v1622, %v1686
        %v1688 = vpop.f32.mrf.mxu0
        %v1689 = vpop.f32.mrf.mxu0
        %v1690 = vpop.f32.mrf.mxu0
        %1691 = vdwg.mxu0
        %v1692 = vadd.f32 %v1502, %v1687
        %1693 = vst.msk [vmem:[%s623] sm:$0xff] %vm635, %v1692
        %s1694 = sand.u32 %s426, 1
        %s1695 = scalar_lea.sflag [#allocation4], %s1694
        %s1696 = sand.u32 %s426, 1
        %s1697 = smul.addr %s1696, 8
        %s1698 = scalar_lea.vmem [#allocation10], %s1697
        // Predicated region
        $region109: #{tpu_custom_call.1} parent=91 // pred_check
          %p1699 = pneg %p436
        $region110: #{tpu_custom_call.1} parent=91 // pred_check_branch
          %1701 = sbr.rel (%p1699) target = $region112
        $region111: #{tpu_custom_call.1} parent=91 // pred_region
          %s1703 = ssub.s32 128, 128
          %1704 = vsyncadd %s1695, %s1703
          %s1705 = smul.addr %s35, 128
          %s1706 = scalar_lea.hbm %s18, %s1705
          %s1708 = sshll.u32 %s1698, 4
          %s1709 = int_to_ptr.vmem [resolvable:$true] %s1708
          %1711 = dma.vmem_to_hbm [thread:$0]  %s1709, 128, %s1706, %s1695
        $region112: #{tpu_custom_call.1} parent=91 // pred_fallthru
          _
      $region92: #{tpu_custom_call.1} parent=5 // pred_fallthru
        _
      %p1712 = scmp.le.s32.totalorder 2, %s30
      // Predicated region
      $region113: #{tpu_custom_call.1} parent=5 // pred_check
        %p1713 = pneg %p1712
      $region114: #{tpu_custom_call.1} parent=5 // pred_check_branch
        %1715 = sbr.rel (%p1713) target = $region116
      $region115: #{tpu_custom_call.1} parent=5 // pred_region
        %s1716 = ssub.s32 %s30, 2
        // Predicated region
        $region117: #{tpu_custom_call.1} parent=115 // pred_check
          %p1717 = pneg %p442
        $region118: #{tpu_custom_call.1} parent=115 // pred_check_branch
          %1719 = sbr.rel (%p1717) target = $region120
        $region119: #{tpu_custom_call.1} parent=115 // pred_region
          %s1720 = sand.u32 %s427, 1
          %s1721 = scalar_lea.sflag [#allocation4], %s1720
          %s1722 = sand.u32 %s427, 1
          %s1723 = smul.addr %s1722, 8
          %s1724 = scalar_lea.vmem [#allocation10], %s1723
          %1725 = dma.done %s1721, 128
        $region120: #{tpu_custom_call.1} parent=115 // pred_fallthru
          _
      $region116: #{tpu_custom_call.1} parent=5 // pred_fallthru
        _
    $region6: #{tpu_custom_call.1} parent=1 // loop_footer
      %s34 = sadd.s32 1, %s30
    $region7: #{tpu_custom_call.1} parent=1 // loop_footer_branch
      %29 = sbr.rel target = $region3
    $region8: #{tpu_custom_call.1} parent=1 // loop_exit
      _
    %1726 = vsyncpa [#allocation3], 1
    %s1727 = scalar_lea.sflag [#allocation3], 1
    %1728 = vsyncpa %s1727, 1
    %1729 = vsyncpa [#allocation6], 1
    %1730 = vsyncpa [#allocation9], 1
    %1731 = vsyncpa [#allocation4], 1
    %s1732 = scalar_lea.sflag [#allocation4], 1
    %1733 = vsyncpa %s1732, 1

</llo_original>
